<compile_context>
chip_gen: v6e
topology: v6e:2x2x1
jax: 0.10.0
libtpu: 0.0.40
codegen_flags: <defaults>
</compile_context>

<pallas_src>
import functools

import jax
import jax.numpy as jnp
import numpy as np
from jax.experimental import pallas as pl
from jax.experimental.pallas import tpu as pltpu


# ---------------------------------------------------------------------------
# Padding rule copied from the PyTorch Conv.forward (TF-style "same" padding).
# ---------------------------------------------------------------------------
def _pad_amounts(h, w, k, s):
    oh = max(0, (h - 1) // s * s + k - h)
    ow = max(0, (w - 1) // s * s + k - w)
    # (top, bottom, left, right)
    return oh // 2, (oh + 1) // 2, ow // 2, (ow + 1) // 2


def same_pad(x_nhwc, k, s):
    n, h, w, c = x_nhwc.shape
    pt, pb, pl_, pr = _pad_amounts(h, w, k, s)
    return jnp.pad(x_nhwc, ((0, 0), (pt, pb), (pl_, pr), (0, 0)))


def _fold_bn(w_hwio, gamma, beta, mean, var, eps=1e-5):
    """Fold inference-mode BN into the conv weights + a per-channel bias."""
    scale = gamma / jnp.sqrt(var + eps)                    # (cout,)
    w = (w_hwio * scale).astype(jnp.float32)               # (kh, kw, cin, cout)
    b = (beta - mean * scale).astype(jnp.float32)          # (cout,)
    return w, b


def _block_diag(w_io, nblocks):
    """(cin, cout) -> block-diagonal (nblocks*cin, nblocks*cout) for 1x1 convs
    operating on the (rows, W*C) lane-dense layout."""
    cin, cout = w_io.shape
    eye = jnp.asarray(np.eye(nblocks, dtype=np.float32))
    m = jnp.einsum('ab,io->aibo', eye, w_io)               # (nb, cin, nb, cout)
    return m.reshape(nblocks * cin, nblocks * cout)


def _band(w_hwio, wp_blocks, wo_blocks, stride, col_off):
    """(kh, kw, cin, cout) -> (kh, wp_blocks*cin, wo_blocks*cout) banded weights.

    Output column block x, tap kx reads input column block x*stride+col_off+kx;
    the kx and channel contractions are folded into one matmul per ky.
    """
    kh, kw, cin, cout = w_hwio.shape
    sel = np.zeros((kw, wp_blocks, wo_blocks), np.float32)
    for kx in range(kw):
        for x in range(wo_blocks):
            cix = x * stride + col_off + kx
            if 0 <= cix < wp_blocks:
                sel[kx, cix, x] = 1.0
    band = jnp.einsum('kab,hkio->haibo', jnp.asarray(sel), w_hwio)
    return band.reshape(kh, wp_blocks * cin, wo_blocks * cout)


# ---------------------------------------------------------------------------
# Fused bottleneck kernel (one grid step == one batch element)
# ---------------------------------------------------------------------------
def _bottleneck_kernel(xp_ref, w0_ref, b0_ref, w1_ref, b1_ref, w2_ref, b2_ref,
                       wd_ref, bd_ref, o_ref, y0_scr, *, h, pt1, dpt, stride):
    # xp_ref:  (1, hp, wp*cin)   input, padded once for the 5x5 conv, C folded
    #                            into the lane dim (lane-dense layout)
    # w0_ref:  (wp*cin, wp*places)   block-diag folded-BN 1x1 weights
    # b0_ref:  (1, wp*places)        tiled bias, ZERO on pad column blocks
    # w1_ref:  (k1, wp*places, wo*places)  banded 5x5 weights
    # w2_ref:  (wo*places, wo*cout)        block-diag 1x1 weights
    # wd_ref:  (kd, wp*cin, wo*cout)       banded 3x3 / identity-selection
    # y0_scr:  (hp, wp*places)  VMEM scratch holding the zero-padded b0 output
    ho = o_ref.shape[1]
    xp = xp_ref[0]                                         # (hp, wp*cin)

    def rows(src, start):
        if stride == 1:
            return src[start:start + ho, :]
        # TODO(synk): for stride > 1 move the decimation into the DMA/index_map;
        # an in-VMEM strided sublane slice is slow (not exercised at stride=1).
        return src[start:start + (ho - 1) * stride + 1:stride, :]

    # --- b0: 1x1 conv (+folded BN) + ReLU, interior rows only, stored into a
    #     zeroed scratch -> scratch == zero-padded ReLU(BN(conv1x1(x))).
    #     Pad columns are exact zeros because b0_ref is zero there.
    y0_scr[...] = jnp.zeros_like(y0_scr)
    y0_scr[pt1:pt1 + h, :] = jnp.maximum(
        jnp.dot(xp[pt1:pt1 + h, :], w0_ref[...],
                preferred_element_type=jnp.float32) + b0_ref[...], 0.0)
    y0 = y0_scr[...]                                       # (hp, wp*places)

    # --- b1: 5x5 conv (+folded BN) + ReLU as k1 banded matmuls (K = wp*places),
    #     full-width leading-dim row slices only -> no per-tap relayout copies.
    acc1 = jnp.zeros((ho, w1_ref.shape[-1]), jnp.float32)
    for ky in range(w1_ref.shape[0]):
        acc1 = acc1 + jnp.dot(rows(y0, ky), w1_ref[ky],
                              preferred_element_type=jnp.float32)
    y1 = jnp.maximum(acc1 + b1_ref[...], 0.0)              # (ho, wo*places)

    # --- b2: 1x1 conv (+folded BN), no activation.
    y2 = jnp.dot(y1, w2_ref[...], preferred_element_type=jnp.float32)
    y2 = y2 + b2_ref[...]                                  # (ho, wo*cout)

    # --- residual: 3x3 downsample conv (or identity selection), same banded path.
    res = jnp.zeros((ho, wd_ref.shape[-1]), jnp.float32)
    for ky in range(wd_ref.shape[0]):
        res = res + jnp.dot(rows(xp, dpt + ky), wd_ref[ky],
                            preferred_element_type=jnp.float32)
    res = res + bd_ref[...]

    # --- add + ReLU, lane-dense store (wo*cout lanes).
    o_ref[0] = jnp.maximum(y2 + res, 0.0).astype(o_ref.dtype)


# ---------------------------------------------------------------------------
# Wrapper: one pallas_call for the whole bottleneck
# ---------------------------------------------------------------------------
def bottleneck_forward(x_nchw, params, *, stride=1, eps=1e-5):
    n, cin, h, w = x_nchw.shape

    k1 = params["b1"][0].shape[0]                          # 5
    pt1, pb1, pl1, pr1 = _pad_amounts(h, w, k1, stride)
    hp, wp = h + pt1 + pb1, w + pl1 + pr1
    ho = (hp - k1) // stride + 1
    wo = (wp - k1) // stride + 1

    # Fold BN (inference mode) into weights + bias on the wrapper side.
    w0, b0 = _fold_bn(*params["b0"], eps=eps)              # (1,1,cin,places)
    w1, b1 = _fold_bn(*params["b1"], eps=eps)              # (k1,k1,places,places)
    w2, b2 = _fold_bn(*params["b2"], eps=eps)              # (1,1,places,cout)
    places = w0.shape[-1]
    cout = w2.shape[-1]

    has_ds = "ds" in params
    if has_ds:
        kd = params["ds"][0].shape[0]                      # 3
        ptd, pbd, pld, prd = _pad_amounts(h, w, kd, stride)
        assert (h + ptd + pbd - kd) // stride + 1 == ho
        assert (w + pld + prd - kd) // stride + 1 == wo
        dpt, dpl = pt1 - ptd, pl1 - pld
        assert dpt >= 0 and dpl >= 0 and pb1 >= pbd and pr1 >= prd
        wd, bd = _fold_bn(*params["ds"], eps=eps)          # (kd,kd,cin,cout)
    else:
        assert stride == 1 and cin == cout
        # identity residual expressed as a 1x1 "conv" with identity weights,
        # so the kernel has a single banded code path.
        kd, dpt, dpl = 1, pt1, pl1
        wd = jnp.eye(cin, dtype=jnp.float32).reshape(1, 1, cin, cout)
        bd = jnp.zeros((cout,), jnp.float32)

    # NCHW -> NHWC, pad ONCE for the widest (5x5) conv, then fold C into W so
    # the lane dim is W*C (lane-dense) instead of C.
    xp = jnp.pad(jnp.transpose(x_nchw, (0, 2, 3, 1)),
                 ((0, 0), (pt1, pb1), (pl1, pr1), (0, 0)))
    xp2 = xp.reshape(n, hp, wp * cin)

    # Compile-time structure tensors (tiny; built per call under jit).
    colmask = np.zeros((wp, 1), np.float32)
    colmask[pl1:pl1 + w] = 1.0                             # interior column blocks

    w0bd = _block_diag(w0[0, 0], wp)                       # (wp*cin, wp*places)
    b0t = (jnp.asarray(colmask) * b0[None, :]).reshape(1, wp * places)
    w1band = _band(w1, wp, wo, stride, 0)                  # (k1, wp*places, wo*places)
    b1t = jnp.tile(b1, wo).reshape(1, wo * places)
    w2bd = _block_diag(w2[0, 0], wo)                       # (wo*places, wo*cout)
    b2t = jnp.tile(b2, wo).reshape(1, wo * cout)
    wdband = _band(wd, wp, wo, stride, dpl)                # (kd, wp*cin, wo*cout)
    bdt = jnp.tile(bd, wo).reshape(1, wo * cout)

    kernel = functools.partial(_bottleneck_kernel,
                               h=h, pt1=pt1, dpt=dpt, stride=stride)

    out_flat = pl.pallas_call(
        kernel,
        out_shape=jax.ShapeDtypeStruct((n, ho, wo * cout), x_nchw.dtype),
        grid=(n,),
        in_specs=[
            pl.BlockSpec((1, hp, wp * cin), lambda i: (i, 0, 0)),
            pl.BlockSpec(w0bd.shape, lambda i: (0, 0)),
            pl.BlockSpec(b0t.shape, lambda i: (0, 0)),
            pl.BlockSpec(w1band.shape, lambda i: (0, 0, 0)),
            pl.BlockSpec(b1t.shape, lambda i: (0, 0)),
            pl.BlockSpec(w2bd.shape, lambda i: (0, 0)),
            pl.BlockSpec(b2t.shape, lambda i: (0, 0)),
            pl.BlockSpec(wdband.shape, lambda i: (0, 0, 0)),
            pl.BlockSpec(bdt.shape, lambda i: (0, 0)),
        ],
        out_specs=pl.BlockSpec((1, ho, wo * cout), lambda i: (i, 0, 0)),
        scratch_shapes=[pltpu.VMEM((hp, wp * places), jnp.float32)],
        compiler_params=pltpu.CompilerParams(
            dimension_semantics=("parallel",)),            # both TCs on v7x
    )(xp2, w0bd, b0t, w1band, b1t, w2bd, b2t, wdband, bdt)

    # (n, ho, wo*cout) -> NCHW; tiny XLA transpose outside the kernel.
    return jnp.transpose(out_flat.reshape(n, ho, wo, cout), (0, 3, 1, 2))


# ---------------------------------------------------------------------------
# Pure-JAX reference (inference-mode BN), for validation
# ---------------------------------------------------------------------------
def _ref_conv(x, w, gamma, beta, mean, var, stride=1, relu=True, eps=1e-5):
    k = w.shape[0]
    xp = same_pad(x, k, stride)
    y = jax.lax.conv_general_dilated(
        xp, w, window_strides=(stride, stride), padding="VALID",
        dimension_numbers=("NHWC", "HWIO", "NHWC"))
    y = (y - mean) / jnp.sqrt(var + eps) * gamma + beta
    if relu:
        y = jnp.maximum(y, 0.0)
    return y


def bottleneck_reference(x_nchw, params, *, stride=1):
    x = jnp.transpose(x_nchw, (0, 2, 3, 1))
    out = _ref_conv(x, *params["b0"], stride=1, relu=True)
    out = _ref_conv(out, *params["b1"], stride=stride, relu=True)
    out = _ref_conv(out, *params["b2"], stride=1, relu=False)
    residual = _ref_conv(x, *params["ds"], stride=stride, relu=False) \
        if "ds" in params else x
    out = jnp.maximum(out + residual, 0.0)
    return jnp.transpose(out, (0, 3, 1, 2))


def _make_conv_params(key, kh, kw, cin, cout):
    k0, k1, k2, k3, k4 = jax.random.split(key, 5)
    w = 0.1 * jax.random.normal(k0, (kh, kw, cin, cout), jnp.float32)
    gamma = 1.0 + 0.1 * jax.random.normal(k1, (cout,), jnp.float32)
    beta = 0.1 * jax.random.normal(k2, (cout,), jnp.float32)
    mean = 0.1 * jax.random.normal(k3, (cout,), jnp.float32)
    var = 0.5 + 0.5 * jnp.abs(jax.random.normal(k4, (cout,), jnp.float32))
    return (w, gamma, beta, mean, var)


if __name__ == "__main__":
    # Bottleneck(in_places=4, places=4, stride=1, expansion=2)
    in_places, places, stride, expansion = 4, 4, 1, 2
    B, H, W = 2, 16, 16

    key = jax.random.PRNGKey(0)
    kx, kb0, kb1, kb2, kds = jax.random.split(key, 5)

    x = jax.random.normal(kx, (B, in_places, H, W), jnp.float32)  # NCHW

    params = {
        "b0": _make_conv_params(kb0, 1, 1, in_places, places),
        "b1": _make_conv_params(kb1, 5, 5, places, places),
        "b2": _make_conv_params(kb2, 1, 1, places, places * expansion),
    }
    downsample = stride > 1 or in_places != places * expansion
    if downsample:
        params["ds"] = _make_conv_params(kds, 3, 3, in_places,
                                         places * expansion)

    fwd = jax.jit(functools.partial(bottleneck_forward, stride=stride))
    out = jax.block_until_ready(fwd(x, params))

    ref = bottleneck_reference(x, params, stride=stride)
    np.testing.assert_allclose(np.asarray(out), np.asarray(ref),
                               rtol=1e-4, atol=1e-4)

    print("KERNEL_OK")
</pallas_src>

<mosaic_0001>
module attributes {stable_mosaic.version = 11 : i64} {
  func.func @_bottleneck_kernel(%arg0: i32, %arg1: memref<1x20x80xf32, #tpu.memory_space<vmem>>, %arg2: memref<80x80xf32, #tpu.memory_space<vmem>>, %arg3: memref<1x80xf32, #tpu.memory_space<vmem>>, %arg4: memref<5x80x64xf32, #tpu.memory_space<vmem>>, %arg5: memref<1x64xf32, #tpu.memory_space<vmem>>, %arg6: memref<64x128xf32, #tpu.memory_space<vmem>>, %arg7: memref<1x128xf32, #tpu.memory_space<vmem>>, %arg8: memref<3x80x128xf32, #tpu.memory_space<vmem>>, %arg9: memref<1x128xf32, #tpu.memory_space<vmem>>, %arg10: memref<1x16x128xf32, #tpu.memory_space<vmem>>, %arg11: memref<20x80xf32, #tpu.memory_space<vmem>>) attributes {dimension_semantics = [#tpu.dimension_semantics<parallel>], iteration_bounds = array<i64: 2>, scalar_prefetch = 0 : i64, scratch_operands = 1 : i64, tpu.core_type = #tpu.core_type<tc>, window_params = [{transform_indices = @transform_0, window_bounds = array<i64: 1, 20, 80>}, {pipeline_mode = #tpu.pipeline_mode<synchronous>, transform_indices = @transform_1, window_bounds = array<i64: 80, 80>}, {pipeline_mode = #tpu.pipeline_mode<synchronous>, transform_indices = @transform_2, window_bounds = array<i64: 1, 80>}, {pipeline_mode = #tpu.pipeline_mode<synchronous>, transform_indices = @transform_3, window_bounds = array<i64: 5, 80, 64>}, {pipeline_mode = #tpu.pipeline_mode<synchronous>, transform_indices = @transform_4, window_bounds = array<i64: 1, 64>}, {pipeline_mode = #tpu.pipeline_mode<synchronous>, transform_indices = @transform_5, window_bounds = array<i64: 64, 128>}, {pipeline_mode = #tpu.pipeline_mode<synchronous>, transform_indices = @transform_6, window_bounds = array<i64: 1, 128>}, {pipeline_mode = #tpu.pipeline_mode<synchronous>, transform_indices = @transform_7, window_bounds = array<i64: 3, 80, 128>}, {pipeline_mode = #tpu.pipeline_mode<synchronous>, transform_indices = @transform_8, window_bounds = array<i64: 1, 128>}, {transform_indices = @transform_9, window_bounds = array<i64: 1, 16, 128>}]} {
    %c0 = arith.constant 0 : index
    %c0_0 = arith.constant 0 : index
    %c0_1 = arith.constant 0 : index
    %0 = vector.load %arg1[%c0, %c0_0, %c0_1] : memref<1x20x80xf32, #tpu.memory_space<vmem>>, vector<1x20x80xf32>
    %1 = vector.shape_cast %0 : vector<1x20x80xf32> to vector<20x80xf32>
    %cst = arith.constant 0.000000e+00 : f32
    %2 = vector.broadcast %cst : f32 to vector<20x80xf32>
    %c0_2 = arith.constant 0 : index
    %c0_3 = arith.constant 0 : index
    %3 = vector.load %arg11[%c0_2, %c0_3] : memref<20x80xf32, #tpu.memory_space<vmem>>, vector<20x80xf32>
    tpu.vector_store %arg11[%c0_2, %c0_3], %2 {strides = array<i32>} : memref<20x80xf32, #tpu.memory_space<vmem>>, vector<20x80xf32>,
    %4 = vector.extract_strided_slice %1 {offsets = [2, 0], sizes = [16, 80], strides = [1, 1]} : vector<20x80xf32> to vector<16x80xf32>
    %c0_4 = arith.constant 0 : index
    %c0_5 = arith.constant 0 : index
    %5 = vector.load %arg2[%c0_4, %c0_5] : memref<80x80xf32, #tpu.memory_space<vmem>>, vector<80x80xf32>
    %cst_6 = arith.constant dense<0.000000e+00> : vector<16x80xf32>
    %6 = tpu.matmul %4, %5, %cst_6 {dimension_numbers = #tpu.dot_dimension_numbers<[1], [0], [0], [1], [0, 0, 1, 1], [], []>} : vector<16x80xf32>, vector<80x80xf32>, vector<16x80xf32> -> vector<16x80xf32>
    %c0_7 = arith.constant 0 : index
    %c0_8 = arith.constant 0 : index
    %7 = vector.load %arg3[%c0_7, %c0_8] : memref<1x80xf32, #tpu.memory_space<vmem>>, vector<1x80xf32>
    %8 = vector.broadcast %7 : vector<1x80xf32> to vector<16x80xf32>
    %9 = arith.addf %6, %8 : vector<16x80xf32>
    %cst_9 = arith.constant 0.000000e+00 : f32
    %10 = vector.broadcast %cst_9 : f32 to vector<16x80xf32>
    %11 = arith.maximumf %9, %10 : vector<16x80xf32>
    %c2 = arith.constant 2 : index
    %c0_10 = arith.constant 0 : index
    %12 = vector.load %arg11[%c2, %c0_10] : memref<20x80xf32, #tpu.memory_space<vmem>>, vector<16x80xf32>
    tpu.vector_store %arg11[%c2, %c0_10], %11 {strides = array<i32>} : memref<20x80xf32, #tpu.memory_space<vmem>>, vector<16x80xf32>,
    %c0_11 = arith.constant 0 : index
    %c0_12 = arith.constant 0 : index
    %13 = vector.load %arg11[%c0_11, %c0_12] : memref<20x80xf32, #tpu.memory_space<vmem>>, vector<20x80xf32>
    %cst_13 = arith.constant 0.000000e+00 : f32
    %14 = vector.broadcast %cst_13 : f32 to vector<16x64xf32>
    %15 = vector.extract_strided_slice %13 {offsets = [0, 0], sizes = [16, 80], strides = [1, 1]} : vector<20x80xf32> to vector<16x80xf32>
    %c0_14 = arith.constant 0 : index
    %c0_15 = arith.constant 0 : index
    %c0_16 = arith.constant 0 : index
    %16 = vector.load %arg4[%c0_14, %c0_15, %c0_16] : memref<5x80x64xf32, #tpu.memory_space<vmem>>, vector<1x80x64xf32>
    %17 = vector.shape_cast %16 : vector<1x80x64xf32> to vector<80x64xf32>
    %cst_17 = arith.constant dense<0.000000e+00> : vector<16x64xf32>
    %18 = tpu.matmul %15, %17, %cst_17 {dimension_numbers = #tpu.dot_dimension_numbers<[1], [0], [0], [1], [0, 0, 1, 1], [], []>} : vector<16x80xf32>, vector<80x64xf32>, vector<16x64xf32> -> vector<16x64xf32>
    %19 = arith.addf %14, %18 : vector<16x64xf32>
    %20 = vector.extract_strided_slice %13 {offsets = [1, 0], sizes = [16, 80], strides = [1, 1]} : vector<20x80xf32> to vector<16x80xf32>
    %c1 = arith.constant 1 : index
    %c0_18 = arith.constant 0 : index
    %c0_19 = arith.constant 0 : index
    %21 = vector.load %arg4[%c1, %c0_18, %c0_19] : memref<5x80x64xf32, #tpu.memory_space<vmem>>, vector<1x80x64xf32>
    %22 = vector.shape_cast %21 : vector<1x80x64xf32> to vector<80x64xf32>
    %cst_20 = arith.constant dense<0.000000e+00> : vector<16x64xf32>
    %23 = tpu.matmul %20, %22, %cst_20 {dimension_numbers = #tpu.dot_dimension_numbers<[1], [0], [0], [1], [0, 0, 1, 1], [], []>} : vector<16x80xf32>, vector<80x64xf32>, vector<16x64xf32> -> vector<16x64xf32>
    %24 = arith.addf %19, %23 : vector<16x64xf32>
    %25 = vector.extract_strided_slice %13 {offsets = [2, 0], sizes = [16, 80], strides = [1, 1]} : vector<20x80xf32> to vector<16x80xf32>
    %c2_21 = arith.constant 2 : index
    %c0_22 = arith.constant 0 : index
    %c0_23 = arith.constant 0 : index
    %26 = vector.load %arg4[%c2_21, %c0_22, %c0_23] : memref<5x80x64xf32, #tpu.memory_space<vmem>>, vector<1x80x64xf32>
    %27 = vector.shape_cast %26 : vector<1x80x64xf32> to vector<80x64xf32>
    %cst_24 = arith.constant dense<0.000000e+00> : vector<16x64xf32>
    %28 = tpu.matmul %25, %27, %cst_24 {dimension_numbers = #tpu.dot_dimension_numbers<[1], [0], [0], [1], [0, 0, 1, 1], [], []>} : vector<16x80xf32>, vector<80x64xf32>, vector<16x64xf32> -> vector<16x64xf32>
    %29 = arith.addf %24, %28 : vector<16x64xf32>
    %30 = vector.extract_strided_slice %13 {offsets = [3, 0], sizes = [16, 80], strides = [1, 1]} : vector<20x80xf32> to vector<16x80xf32>
    %c3 = arith.constant 3 : index
    %c0_25 = arith.constant 0 : index
    %c0_26 = arith.constant 0 : index
    %31 = vector.load %arg4[%c3, %c0_25, %c0_26] : memref<5x80x64xf32, #tpu.memory_space<vmem>>, vector<1x80x64xf32>
    %32 = vector.shape_cast %31 : vector<1x80x64xf32> to vector<80x64xf32>
    %cst_27 = arith.constant dense<0.000000e+00> : vector<16x64xf32>
    %33 = tpu.matmul %30, %32, %cst_27 {dimension_numbers = #tpu.dot_dimension_numbers<[1], [0], [0], [1], [0, 0, 1, 1], [], []>} : vector<16x80xf32>, vector<80x64xf32>, vector<16x64xf32> -> vector<16x64xf32>
    %34 = arith.addf %29, %33 : vector<16x64xf32>
    %35 = vector.extract_strided_slice %13 {offsets = [4, 0], sizes = [16, 80], strides = [1, 1]} : vector<20x80xf32> to vector<16x80xf32>
    %c4 = arith.constant 4 : index
    %c0_28 = arith.constant 0 : index
    %c0_29 = arith.constant 0 : index
    %36 = vector.load %arg4[%c4, %c0_28, %c0_29] : memref<5x80x64xf32, #tpu.memory_space<vmem>>, vector<1x80x64xf32>
    %37 = vector.shape_cast %36 : vector<1x80x64xf32> to vector<80x64xf32>
    %cst_30 = arith.constant dense<0.000000e+00> : vector<16x64xf32>
    %38 = tpu.matmul %35, %37, %cst_30 {dimension_numbers = #tpu.dot_dimension_numbers<[1], [0], [0], [1], [0, 0, 1, 1], [], []>} : vector<16x80xf32>, vector<80x64xf32>, vector<16x64xf32> -> vector<16x64xf32>
    %39 = arith.addf %34, %38 : vector<16x64xf32>
    %c0_31 = arith.constant 0 : index
    %c0_32 = arith.constant 0 : index
    %40 = vector.load %arg5[%c0_31, %c0_32] : memref<1x64xf32, #tpu.memory_space<vmem>>, vector<1x64xf32>
    %41 = vector.broadcast %40 : vector<1x64xf32> to vector<16x64xf32>
    %42 = arith.addf %39, %41 : vector<16x64xf32>
    %cst_33 = arith.constant 0.000000e+00 : f32
    %43 = vector.broadcast %cst_33 : f32 to vector<16x64xf32>
    %44 = arith.maximumf %42, %43 : vector<16x64xf32>
    %c0_34 = arith.constant 0 : index
    %c0_35 = arith.constant 0 : index
    %45 = vector.load %arg6[%c0_34, %c0_35] : memref<64x128xf32, #tpu.memory_space<vmem>>, vector<64x128xf32>
    %cst_36 = arith.constant dense<0.000000e+00> : vector<16x128xf32>
    %46 = tpu.matmul %44, %45, %cst_36 {dimension_numbers = #tpu.dot_dimension_numbers<[1], [0], [0], [1], [0, 0, 1, 1], [], []>} : vector<16x64xf32>, vector<64x128xf32>, vector<16x128xf32> -> vector<16x128xf32>
    %c0_37 = arith.constant 0 : index
    %c0_38 = arith.constant 0 : index
    %47 = vector.load %arg7[%c0_37, %c0_38] : memref<1x128xf32, #tpu.memory_space<vmem>>, vector<1x128xf32>
    %48 = vector.broadcast %47 : vector<1x128xf32> to vector<16x128xf32>
    %49 = arith.addf %46, %48 : vector<16x128xf32>
    %cst_39 = arith.constant 0.000000e+00 : f32
    %50 = vector.broadcast %cst_39 : f32 to vector<16x128xf32>
    %51 = vector.extract_strided_slice %1 {offsets = [1, 0], sizes = [16, 80], strides = [1, 1]} : vector<20x80xf32> to vector<16x80xf32>
    %c0_40 = arith.constant 0 : index
    %c0_41 = arith.constant 0 : index
    %c0_42 = arith.constant 0 : index
    %52 = vector.load %arg8[%c0_40, %c0_41, %c0_42] : memref<3x80x128xf32, #tpu.memory_space<vmem>>, vector<1x80x128xf32>
    %53 = vector.shape_cast %52 : vector<1x80x128xf32> to vector<80x128xf32>
    %cst_43 = arith.constant dense<0.000000e+00> : vector<16x128xf32>
    %54 = tpu.matmul %51, %53, %cst_43 {dimension_numbers = #tpu.dot_dimension_numbers<[1], [0], [0], [1], [0, 0, 1, 1], [], []>} : vector<16x80xf32>, vector<80x128xf32>, vector<16x128xf32> -> vector<16x128xf32>
    %55 = arith.addf %50, %54 : vector<16x128xf32>
    %56 = vector.extract_strided_slice %1 {offsets = [2, 0], sizes = [16, 80], strides = [1, 1]} : vector<20x80xf32> to vector<16x80xf32>
    %c1_44 = arith.constant 1 : index
    %c0_45 = arith.constant 0 : index
    %c0_46 = arith.constant 0 : index
    %57 = vector.load %arg8[%c1_44, %c0_45, %c0_46] : memref<3x80x128xf32, #tpu.memory_space<vmem>>, vector<1x80x128xf32>
    %58 = vector.shape_cast %57 : vector<1x80x128xf32> to vector<80x128xf32>
    %cst_47 = arith.constant dense<0.000000e+00> : vector<16x128xf32>
    %59 = tpu.matmul %56, %58, %cst_47 {dimension_numbers = #tpu.dot_dimension_numbers<[1], [0], [0], [1], [0, 0, 1, 1], [], []>} : vector<16x80xf32>, vector<80x128xf32>, vector<16x128xf32> -> vector<16x128xf32>
    %60 = arith.addf %55, %59 : vector<16x128xf32>
    %61 = vector.extract_strided_slice %1 {offsets = [3, 0], sizes = [16, 80], strides = [1, 1]} : vector<20x80xf32> to vector<16x80xf32>
    %c2_48 = arith.constant 2 : index
    %c0_49 = arith.constant 0 : index
    %c0_50 = arith.constant 0 : index
    %62 = vector.load %arg8[%c2_48, %c0_49, %c0_50] : memref<3x80x128xf32, #tpu.memory_space<vmem>>, vector<1x80x128xf32>
    %63 = vector.shape_cast %62 : vector<1x80x128xf32> to vector<80x128xf32>
    %cst_51 = arith.constant dense<0.000000e+00> : vector<16x128xf32>
    %64 = tpu.matmul %61, %63, %cst_51 {dimension_numbers = #tpu.dot_dimension_numbers<[1], [0], [0], [1], [0, 0, 1, 1], [], []>} : vector<16x80xf32>, vector<80x128xf32>, vector<16x128xf32> -> vector<16x128xf32>
    %65 = arith.addf %60, %64 : vector<16x128xf32>
    %c0_52 = arith.constant 0 : index
    %c0_53 = arith.constant 0 : index
    %66 = vector.load %arg9[%c0_52, %c0_53] : memref<1x128xf32, #tpu.memory_space<vmem>>, vector<1x128xf32>
    %67 = vector.broadcast %66 : vector<1x128xf32> to vector<16x128xf32>
    %68 = arith.addf %65, %67 : vector<16x128xf32>
    %69 = arith.addf %49, %68 : vector<16x128xf32>
    %cst_54 = arith.constant 0.000000e+00 : f32
    %70 = vector.broadcast %cst_54 : f32 to vector<16x128xf32>
    %71 = arith.maximumf %69, %70 : vector<16x128xf32>
    %c0_55 = arith.constant 0 : index
    %c0_56 = arith.constant 0 : index
    %c0_57 = arith.constant 0 : index
    %72 = vector.load %arg10[%c0_55, %c0_56, %c0_57] : memref<1x16x128xf32, #tpu.memory_space<vmem>>, vector<1x16x128xf32>
    %73 = vector.shape_cast %72 : vector<1x16x128xf32> to vector<16x128xf32>
    %74 = vector.shape_cast %71 : vector<16x128xf32> to vector<1x16x128xf32>
    tpu.vector_store %arg10[%c0_55, %c0_56, %c0_57], %74 {strides = array<i32>} : memref<1x16x128xf32, #tpu.memory_space<vmem>>, vector<1x16x128xf32>,
    return
  }
  func.func @transform_0(%arg0: i32) -> (i32, i32, i32) {
    %c0_i32 = arith.constant 0 : i32
    %c0_i32_0 = arith.constant 0 : i32
    %c0_i32_1 = arith.constant 0 : i32
    return %arg0, %c0_i32, %c0_i32_0 : i32, i32, i32
  }
  func.func @transform_1(%arg0: i32) -> (i32, i32) {
    %c0_i32 = arith.constant 0 : i32
    %c0_i32_0 = arith.constant 0 : i32
    %c0_i32_1 = arith.constant 0 : i32
    return %c0_i32, %c0_i32_0 : i32, i32
  }
  func.func @transform_2(%arg0: i32) -> (i32, i32) {
    %c0_i32 = arith.constant 0 : i32
    %c0_i32_0 = arith.constant 0 : i32
    %c0_i32_1 = arith.constant 0 : i32
    return %c0_i32, %c0_i32_0 : i32, i32
  }
  func.func @transform_3(%arg0: i32) -> (i32, i32, i32) {
    %c0_i32 = arith.constant 0 : i32
    %c0_i32_0 = arith.constant 0 : i32
    %c0_i32_1 = arith.constant 0 : i32
    %c0_i32_2 = arith.constant 0 : i32
    return %c0_i32, %c0_i32_0, %c0_i32_1 : i32, i32, i32
  }
  func.func @transform_4(%arg0: i32) -> (i32, i32) {
    %c0_i32 = arith.constant 0 : i32
    %c0_i32_0 = arith.constant 0 : i32
    %c0_i32_1 = arith.constant 0 : i32
    return %c0_i32, %c0_i32_0 : i32, i32
  }
  func.func @transform_5(%arg0: i32) -> (i32, i32) {
    %c0_i32 = arith.constant 0 : i32
    %c0_i32_0 = arith.constant 0 : i32
    %c0_i32_1 = arith.constant 0 : i32
    return %c0_i32, %c0_i32_0 : i32, i32
  }
  func.func @transform_6(%arg0: i32) -> (i32, i32) {
    %c0_i32 = arith.constant 0 : i32
    %c0_i32_0 = arith.constant 0 : i32
    %c0_i32_1 = arith.constant 0 : i32
    return %c0_i32, %c0_i32_0 : i32, i32
  }
  func.func @transform_7(%arg0: i32) -> (i32, i32, i32) {
    %c0_i32 = arith.constant 0 : i32
    %c0_i32_0 = arith.constant 0 : i32
    %c0_i32_1 = arith.constant 0 : i32
    %c0_i32_2 = arith.constant 0 : i32
    return %c0_i32, %c0_i32_0, %c0_i32_1 : i32, i32, i32
  }
  func.func @transform_8(%arg0: i32) -> (i32, i32) {
    %c0_i32 = arith.constant 0 : i32
    %c0_i32_0 = arith.constant 0 : i32
    %c0_i32_1 = arith.constant 0 : i32
    return %c0_i32, %c0_i32_0 : i32, i32
  }
  func.func @transform_9(%arg0: i32) -> (i32, i32, i32) {
    %c0_i32 = arith.constant 0 : i32
    %c0_i32_0 = arith.constant 0 : i32
    %c0_i32_1 = arith.constant 0 : i32
    return %arg0, %c0_i32, %c0_i32_0 : i32, i32, i32
  }
}

</mosaic_0001>

<llo_original>
// kernel: tile.18
$region0: #{tile.18}
  #allocation0 [shape = 's32[1]{0}', space=sflag, size = 0x4, scoped, tag = 'scoped memory for tile.18']
  %s0 = inlined_call_operand.vmem [shape: f32[4], index: 0, kind: input, shape index: {}]
  %s1 = inlined_call_operand.vmem [shape: f32[16,4], index: 1, kind: output, shape index: {}]
  // Predicated region
  $region2: #{tile.18} parent=0 // pred_check
    _
  $region3: #{tile.18} parent=0 // pred_check_branch
    %3 = sbr.rel (0) target = $region5
  $region4: #{tile.18} parent=0 // pred_region
    _
  $region5: #{tile.18} parent=0 // pred_fallthru
    _
  %v4 = vld [vmem:[%s0] ss:$0 sm:$0xff]
  %5 = vst [vmem:[%s1] sm:$0xff] %v4
  %s6 = scalar_lea.vmem %s1, 8
  %7 = vst [vmem:[%s6] sm:$0xff] %v4

// kernel: tile.19
$region0: #{tile.19}
  %s0 = inlined_call_operand.vmem [shape: f32[16,4], index: 0, kind: input, shape index: {}]
  %s1 = inlined_call_operand.vmem [shape: f32[1,64], index: 1, kind: output, shape index: {}]
  $region1: #{tile.19} parent=0
    #allocation0 [shape = 'u8[4096]{0}', space=vmem, size = 0x1000, scoped, tag = 'scoped mem for output reshape']
    %v2 = vld [vmem:[%s0] sm:$0x1]
    %vm3 = vcmask 31744
    %4 = vst.msk [vmem:[#allocation0] sm:$0x1] %vm3, %v2
    %s5 = scalar_lea.vmem %s0, 15
    %v6 = vld [vmem:[%s5] sm:$0x1]
    %7 = vrot.lane.b32.xlu0 %v6, 60
    %v8 = vpop.permute.xlu0 %7
    %vm9 = vcmask 523744
    %10 = vst.msk [vmem:[#allocation0] sm:$0x1] %vm9, %v8
    %s11 = scalar_lea.vmem %s0, 14
    %v12 = vld [vmem:[%s11] sm:$0x1]
    %13 = vrot.lane.b32.xlu0 %v12, 56
    %v14 = vpop.permute.xlu0 %13
    %vm15 = vcmask 490944
    %16 = vst.msk [vmem:[#allocation0] sm:$0x1] %vm15, %v14
    %s17 = scalar_lea.vmem %s0, 13
    %v18 = vld [vmem:[%s17] sm:$0x1]
    %19 = vrot.lane.b32.xlu0 %v18, 52
    %v20 = vpop.permute.xlu0 %19
    %vm21 = vcmask 458144
    %22 = vst.msk [vmem:[#allocation0] sm:$0x1] %vm21, %v20
    %s23 = scalar_lea.vmem %s0, 12
    %v24 = vld [vmem:[%s23] sm:$0x1]
    %25 = vrot.lane.b32.xlu0 %v24, 48
    %v26 = vpop.permute.xlu0 %25
    %vm27 = vcmask 425344
    %28 = vst.msk [vmem:[#allocation0] sm:$0x1] %vm27, %v26
    %s29 = scalar_lea.vmem %s0, 11
    %v30 = vld [vmem:[%s29] sm:$0x1]
    %31 = vrot.lane.b32.xlu0 %v30, 44
    %v32 = vpop.permute.xlu0 %31
    %vm33 = vcmask 392544
    %34 = vst.msk [vmem:[#allocation0] sm:$0x1] %vm33, %v32
    %s35 = scalar_lea.vmem %s0, 10
    %v36 = vld [vmem:[%s35] sm:$0x1]
    %37 = vrot.lane.b32.xlu0 %v36, 40
    %v38 = vpop.permute.xlu0 %37
    %vm39 = vcmask 359744
    %40 = vst.msk [vmem:[#allocation0] sm:$0x1] %vm39, %v38
    %s41 = scalar_lea.vmem %s0, 9
    %v42 = vld [vmem:[%s41] sm:$0x1]
    %43 = vrot.lane.b32.xlu0 %v42, 36
    %v44 = vpop.permute.xlu0 %43
    %vm45 = vcmask 326944
    %46 = vst.msk [vmem:[#allocation0] sm:$0x1] %vm45, %v44
    %s47 = scalar_lea.vmem %s0, 8
    %v48 = vld [vmem:[%s47] sm:$0x1]
    %49 = vrot.lane.b32.xlu0 %v48, 32
    %v50 = vpop.permute.xlu0 %49
    %vm51 = vcmask 294144
    %52 = vst.msk [vmem:[#allocation0] sm:$0x1] %vm51, %v50
    %s53 = scalar_lea.vmem %s0, 7
    %v54 = vld [vmem:[%s53] sm:$0x1]
    %55 = vrot.lane.b32.xlu0 %v54, 28
    %v56 = vpop.permute.xlu0 %55
    %vm57 = vcmask 261344
    %58 = vst.msk [vmem:[#allocation0] sm:$0x1] %vm57, %v56
    %s59 = scalar_lea.vmem %s0, 6
    %v60 = vld [vmem:[%s59] sm:$0x1]
    %61 = vrot.lane.b32.xlu0 %v60, 24
    %v62 = vpop.permute.xlu0 %61
    %vm63 = vcmask 228544
    %64 = vst.msk [vmem:[#allocation0] sm:$0x1] %vm63, %v62
    %s65 = scalar_lea.vmem %s0, 5
    %v66 = vld [vmem:[%s65] sm:$0x1]
    %67 = vrot.lane.b32.xlu0 %v66, 20
    %v68 = vpop.permute.xlu0 %67
    %vm69 = vcmask 195744
    %70 = vst.msk [vmem:[#allocation0] sm:$0x1] %vm69, %v68
    %s71 = scalar_lea.vmem %s0, 4
    %v72 = vld [vmem:[%s71] sm:$0x1]
    %73 = vrot.lane.b32.xlu0 %v72, 16
    %v74 = vpop.permute.xlu0 %73
    %vm75 = vcmask 162944
    %76 = vst.msk [vmem:[#allocation0] sm:$0x1] %vm75, %v74
    %s77 = scalar_lea.vmem %s0, 3
    %v78 = vld [vmem:[%s77] sm:$0x1]
    %79 = vrot.lane.b32.xlu0 %v78, 12
    %v80 = vpop.permute.xlu0 %79
    %vm81 = vcmask 130144
    %82 = vst.msk [vmem:[#allocation0] sm:$0x1] %vm81, %v80
    %s83 = scalar_lea.vmem %s0, 2
    %v84 = vld [vmem:[%s83] sm:$0x1]
    %85 = vrot.lane.b32.xlu0 %v84, 8
    %v86 = vpop.permute.xlu0 %85
    %vm87 = vcmask 97344
    %88 = vst.msk [vmem:[#allocation0] sm:$0x1] %vm87, %v86
    %s89 = scalar_lea.vmem %s0, 1
    %v90 = vld [vmem:[%s89] sm:$0x1]
    %91 = vrot.lane.b32.xlu0 %v90, 4
    %v92 = vpop.permute.xlu0 %91
    %vm93 = vcmask 64544
    %94 = vst.msk [vmem:[#allocation0] sm:$0x1] %vm93, %v92
    %s96 = sshll.u32 1, 1
    %s97 = ssub.s32 %s96, 1
    %v99 = vld [vmem:[#allocation0] sm:%s97]
    %s100 = sshll.u32 1, 1
    %s101 = ssub.s32 %s100, 1
    %102 = vst [vmem:[%s1] sm:%s101] %v99

// kernel: tile.23
$region0: #{tile.23}
  #allocation0 [shape = 's32[1]{0}', space=sflag, size = 0x4, scoped, tag = 'scoped memory for tile.23']
  %s0 = inlined_call_operand.vmem [shape: f32[8], index: 0, kind: input, shape index: {}]
  %s1 = inlined_call_operand.vmem [shape: f32[16,8], index: 1, kind: output, shape index: {}]
  // Predicated region
  $region2: #{tile.23} parent=0 // pred_check
    _
  $region3: #{tile.23} parent=0 // pred_check_branch
    %3 = sbr.rel (0) target = $region5
  $region4: #{tile.23} parent=0 // pred_region
    _
  $region5: #{tile.23} parent=0 // pred_fallthru
    _
  %v4 = vld [vmem:[%s0] ss:$0 sm:$0xff]
  %5 = vst [vmem:[%s1] sm:$0xff] %v4
  %s6 = scalar_lea.vmem %s1, 8
  %7 = vst [vmem:[%s6] sm:$0xff] %v4

// kernel: tile.24
$region0: #{tile.24}
  %s0 = inlined_call_operand.vmem [shape: f32[16,8], index: 0, kind: input, shape index: {}]
  %s1 = inlined_call_operand.vmem [shape: f32[1,128], index: 1, kind: output, shape index: {}]
  $region1: #{tile.24} parent=0
    #allocation0 [shape = 'u8[4096]{0}', space=vmem, size = 0x1000, scoped, tag = 'scoped mem for output reshape']
    %v2 = vld [vmem:[%s0] sm:$0x1]
    %vm3 = vcmask 64512
    %4 = vst.msk [vmem:[#allocation0] sm:$0x1] %vm3, %v2
    %s5 = scalar_lea.vmem %s0, 15
    %v6 = vld [vmem:[%s5] sm:$0x1]
    %7 = vrot.lane.b32.xlu0 %v6, 120
    %v8 = vpop.permute.xlu0 %7
    %vm9 = vcmask 1048512
    %10 = vst.msk [vmem:[#allocation0] sm:$0x1] %vm9, %v8
    %s11 = scalar_lea.vmem %s0, 14
    %v12 = vld [vmem:[%s11] sm:$0x1]
    %13 = vrot.lane.b32.xlu0 %v12, 112
    %v14 = vpop.permute.xlu0 %13
    %vm15 = vcmask 982912
    %16 = vst.msk [vmem:[#allocation0] sm:$0x1] %vm15, %v14
    %s17 = scalar_lea.vmem %s0, 13
    %v18 = vld [vmem:[%s17] sm:$0x1]
    %19 = vrot.lane.b32.xlu0 %v18, 104
    %v20 = vpop.permute.xlu0 %19
    %vm21 = vcmask 917312
    %22 = vst.msk [vmem:[#allocation0] sm:$0x1] %vm21, %v20
    %s23 = scalar_lea.vmem %s0, 12
    %v24 = vld [vmem:[%s23] sm:$0x1]
    %25 = vrot.lane.b32.xlu0 %v24, 96
    %v26 = vpop.permute.xlu0 %25
    %vm27 = vcmask 851712
    %28 = vst.msk [vmem:[#allocation0] sm:$0x1] %vm27, %v26
    %s29 = scalar_lea.vmem %s0, 11
    %v30 = vld [vmem:[%s29] sm:$0x1]
    %31 = vrot.lane.b32.xlu0 %v30, 88
    %v32 = vpop.permute.xlu0 %31
    %vm33 = vcmask 786112
    %34 = vst.msk [vmem:[#allocation0] sm:$0x1] %vm33, %v32
    %s35 = scalar_lea.vmem %s0, 10
    %v36 = vld [vmem:[%s35] sm:$0x1]
    %37 = vrot.lane.b32.xlu0 %v36, 80
    %v38 = vpop.permute.xlu0 %37
    %vm39 = vcmask 720512
    %40 = vst.msk [vmem:[#allocation0] sm:$0x1] %vm39, %v38
    %s41 = scalar_lea.vmem %s0, 9
    %v42 = vld [vmem:[%s41] sm:$0x1]
    %43 = vrot.lane.b32.xlu0 %v42, 72
    %v44 = vpop.permute.xlu0 %43
    %vm45 = vcmask 654912
    %46 = vst.msk [vmem:[#allocation0] sm:$0x1] %vm45, %v44
    %s47 = scalar_lea.vmem %s0, 8
    %v48 = vld [vmem:[%s47] sm:$0x1]
    %49 = vrot.lane.b32.xlu0 %v48, 64
    %v50 = vpop.permute.xlu0 %49
    %vm51 = vcmask 589312
    %52 = vst.msk [vmem:[#allocation0] sm:$0x1] %vm51, %v50
    %s53 = scalar_lea.vmem %s0, 7
    %v54 = vld [vmem:[%s53] sm:$0x1]
    %55 = vrot.lane.b32.xlu0 %v54, 56
    %v56 = vpop.permute.xlu0 %55
    %vm57 = vcmask 523712
    %58 = vst.msk [vmem:[#allocation0] sm:$0x1] %vm57, %v56
    %s59 = scalar_lea.vmem %s0, 6
    %v60 = vld [vmem:[%s59] sm:$0x1]
    %61 = vrot.lane.b32.xlu0 %v60, 48
    %v62 = vpop.permute.xlu0 %61
    %vm63 = vcmask 458112
    %64 = vst.msk [vmem:[#allocation0] sm:$0x1] %vm63, %v62
    %s65 = scalar_lea.vmem %s0, 5
    %v66 = vld [vmem:[%s65] sm:$0x1]
    %67 = vrot.lane.b32.xlu0 %v66, 40
    %v68 = vpop.permute.xlu0 %67
    %vm69 = vcmask 392512
    %70 = vst.msk [vmem:[#allocation0] sm:$0x1] %vm69, %v68
    %s71 = scalar_lea.vmem %s0, 4
    %v72 = vld [vmem:[%s71] sm:$0x1]
    %73 = vrot.lane.b32.xlu0 %v72, 32
    %v74 = vpop.permute.xlu0 %73
    %vm75 = vcmask 326912
    %76 = vst.msk [vmem:[#allocation0] sm:$0x1] %vm75, %v74
    %s77 = scalar_lea.vmem %s0, 3
    %v78 = vld [vmem:[%s77] sm:$0x1]
    %79 = vrot.lane.b32.xlu0 %v78, 24
    %v80 = vpop.permute.xlu0 %79
    %vm81 = vcmask 261312
    %82 = vst.msk [vmem:[#allocation0] sm:$0x1] %vm81, %v80
    %s83 = scalar_lea.vmem %s0, 2
    %v84 = vld [vmem:[%s83] sm:$0x1]
    %85 = vrot.lane.b32.xlu0 %v84, 16
    %v86 = vpop.permute.xlu0 %85
    %vm87 = vcmask 195712
    %88 = vst.msk [vmem:[#allocation0] sm:$0x1] %vm87, %v86
    %s89 = scalar_lea.vmem %s0, 1
    %v90 = vld [vmem:[%s89] sm:$0x1]
    %91 = vrot.lane.b32.xlu0 %v90, 8
    %v92 = vpop.permute.xlu0 %91
    %vm93 = vcmask 130112
    %94 = vst.msk [vmem:[#allocation0] sm:$0x1] %vm93, %v92
    %s96 = sshll.u32 1, 1
    %s97 = ssub.s32 %s96, 1
    %v99 = vld [vmem:[#allocation0] sm:%s97]
    %s100 = sshll.u32 1, 1
    %s101 = ssub.s32 %s100, 1
    %102 = vst [vmem:[%s1] sm:%s101] %v99

// kernel: bottleneck_forward.1
$region0: #{bottleneck_forward.1}
  #allocation0 [shape = 'u32[]', space=smem, size = 0x4, offset = 0x4, fixed_abs, tag = 'smem constant byte address 0x4 - core index']
  #allocation1 [shape = 'u32[144,128]{1,0:T(1,128)}', space=vmem, size = 0x12000, scoped, tag = 'internal scratch']
  #allocation2 [shape = 'f32[20,80]{1,0:T(8,128)}', space=vmem, size = 0x3000, scoped, tag = 'scratch operand']
  %s0 = inlined_call_operand.vmem [shape: f32[2,20,80], index: 0, kind: input, shape index: {}]
  %s1 = inlined_call_operand.vmem [shape: f32[80,80], index: 1, kind: input, shape index: {}]
  %s2 = inlined_call_operand.vmem [shape: f32[1,80], index: 2, kind: input, shape index: {}]
  %s3 = inlined_call_operand.vmem [shape: f32[5,80,64], index: 3, kind: input, shape index: {}]
  %s4 = inlined_call_operand.vmem [shape: f32[1,64], index: 4, kind: input, shape index: {}]
  %s5 = inlined_call_operand.vmem [shape: f32[64,128], index: 5, kind: input, shape index: {}]
  %s6 = inlined_call_operand.vmem [shape: f32[1,128], index: 6, kind: input, shape index: {}]
  %s7 = inlined_call_operand.vmem [shape: f32[3,80,128], index: 7, kind: input, shape index: {}]
  %s8 = inlined_call_operand.vmem [shape: f32[1,128], index: 8, kind: input, shape index: {}]
  %s9 = inlined_call_operand.vmem [shape: f32[2,16,128], index: 9, kind: output, shape index: {}]
  %s10 = sld [smem:[#allocation0]]
  $region69: #{bottleneck_forward.1} parent=0
    _
  %s12 = ssub.s32 1, %s10
  %s13 = scalar_select 0, %s12, %s10
  loop: start=0, step=1, limit=4
  $region2: #{bottleneck_forward.1} parent=0 // loop_pre_header
    _
  $region3: #{bottleneck_forward.1} parent=0 // loop_header
    %s15 = sphi 0, %s19
    %p16 = scmp.ge.s32.totalorder %s15, 4
    %s25 = sphi 0, %s27
    %s28 = sphi 0, %s25
    %s29 = sphi 0, %s28
    %s45 = sphi 0, %s29
    %s49 = sphi 0, %s49
    %s51 = sphi 0, %s49
    %s52 = sphi 0, %s51
    %s66 = sphi 0, %s52
    %s70 = sphi 0, %s70
    %s72 = sphi 0, %s70
    %s73 = sphi 0, %s72
    %s87 = sphi 0, %s73
    %s91 = sphi 0, %s91
    %s93 = sphi 0, %s91
    %s94 = sphi 0, %s93
    %s108 = sphi 0, %s94
    %s112 = sphi 0, %s112
    %s114 = sphi 0, %s112
    %s115 = sphi 0, %s114
    %s129 = sphi 0, %s115
    %s133 = sphi 0, %s133
    %s135 = sphi 0, %s133
    %s136 = sphi 0, %s135
    %s150 = sphi 0, %s136
    %s154 = sphi 0, %s154
    %s156 = sphi 0, %s154
    %s157 = sphi 0, %s156
    %s171 = sphi 0, %s157
    %s175 = sphi 0, %s175
    %s177 = sphi 0, %s175
    %s178 = sphi 0, %s177
    %s192 = sphi 0, %s178
    %s196 = sphi 0, %s196
    %s198 = sphi 0, %s196
    %s199 = sphi 0, %s198
    %s213 = sphi 0, %s199
    %s219 = sphi 0, %s221
    %s222 = sphi 0, %s219
    %s223 = sphi 0, %s222
    %s239 = sphi 0, %s223
  $region4: #{bottleneck_forward.1} parent=0 // loop_header_branch
    %18 = sbr.rel (%p16) target = $region8
  $region5: #{bottleneck_forward.1} parent=0 // loop_body
    %s20 = ssub.s32 %s15, 1
    %s21 = ssub.s32 %s15, 2
    %s22 = sadd.s32 %s15, 1
    %s23 = ssub.s32 %s15, %s22
    %p24 = scmp.eq.s32.totalorder %s23, 0
    %s26 = sadd.s32 %s25, 1
    %s27 = scalar_select %p24, %s25, %s26
    %p30 = pneg %p24
    %p31 = scmp.eq.s32.totalorder %s15, 1
    %p32 = por %p30, %p31
    %p33 = scmp.ne.s32.totalorder %s25, %s28
    %p34 = scmp.eq.s32.totalorder %s15, 0
    %p35 = por %p33, %p34
    %p36 = scmp.ne.s32.totalorder %s25, %s28
    %p37 = scmp.eq.s32.totalorder %s20, 1
    %p38 = por %p36, %p37
    %p39 = scmp.ne.s32.totalorder %s28, %s29
    %p40 = scmp.eq.s32.totalorder %s20, 0
    %p41 = por %p39, %p40
    %p42 = scmp.ne.s32.totalorder %s28, %s29
    %p43 = scmp.eq.s32.totalorder %s21, 1
    %p44 = por %p42, %p43
    %p46 = scmp.ne.s32.totalorder %s29, %s45
    %p47 = scmp.eq.s32.totalorder %s21, 0
    %p48 = por %p46, %p47
    %s50 = sadd.s32 %s49, 1
    %p53 = scmp.eq.s32.totalorder %s15, 1
    %p54 = scmp.ne.s32.totalorder %s49, %s51
    %p55 = scmp.eq.s32.totalorder %s15, 0
    %p56 = por %p54, %p55
    %p57 = scmp.ne.s32.totalorder %s49, %s51
    %p58 = scmp.eq.s32.totalorder %s20, 1
    %p59 = por %p57, %p58
    %p60 = scmp.ne.s32.totalorder %s51, %s52
    %p61 = scmp.eq.s32.totalorder %s20, 0
    %p62 = por %p60, %p61
    %p63 = scmp.ne.s32.totalorder %s51, %s52
    %p64 = scmp.eq.s32.totalorder %s21, 1
    %p65 = por %p63, %p64
    %p67 = scmp.ne.s32.totalorder %s52, %s66
    %p68 = scmp.eq.s32.totalorder %s21, 0
    %p69 = por %p67, %p68
    %s71 = sadd.s32 %s70, 1
    %p74 = scmp.eq.s32.totalorder %s15, 1
    %p75 = scmp.ne.s32.totalorder %s70, %s72
    %p76 = scmp.eq.s32.totalorder %s15, 0
    %p77 = por %p75, %p76
    %p78 = scmp.ne.s32.totalorder %s70, %s72
    %p79 = scmp.eq.s32.totalorder %s20, 1
    %p80 = por %p78, %p79
    %p81 = scmp.ne.s32.totalorder %s72, %s73
    %p82 = scmp.eq.s32.totalorder %s20, 0
    %p83 = por %p81, %p82
    %p84 = scmp.ne.s32.totalorder %s72, %s73
    %p85 = scmp.eq.s32.totalorder %s21, 1
    %p86 = por %p84, %p85
    %p88 = scmp.ne.s32.totalorder %s73, %s87
    %p89 = scmp.eq.s32.totalorder %s21, 0
    %p90 = por %p88, %p89
    %s92 = sadd.s32 %s91, 1
    %p95 = scmp.eq.s32.totalorder %s15, 1
    %p96 = scmp.ne.s32.totalorder %s91, %s93
    %p97 = scmp.eq.s32.totalorder %s15, 0
    %p98 = por %p96, %p97
    %p99 = scmp.ne.s32.totalorder %s91, %s93
    %p100 = scmp.eq.s32.totalorder %s20, 1
    %p101 = por %p99, %p100
    %p102 = scmp.ne.s32.totalorder %s93, %s94
    %p103 = scmp.eq.s32.totalorder %s20, 0
    %p104 = por %p102, %p103
    %p105 = scmp.ne.s32.totalorder %s93, %s94
    %p106 = scmp.eq.s32.totalorder %s21, 1
    %p107 = por %p105, %p106
    %p109 = scmp.ne.s32.totalorder %s94, %s108
    %p110 = scmp.eq.s32.totalorder %s21, 0
    %p111 = por %p109, %p110
    %s113 = sadd.s32 %s112, 1
    %p116 = scmp.eq.s32.totalorder %s15, 1
    %p117 = scmp.ne.s32.totalorder %s112, %s114
    %p118 = scmp.eq.s32.totalorder %s15, 0
    %p119 = por %p117, %p118
    %p120 = scmp.ne.s32.totalorder %s112, %s114
    %p121 = scmp.eq.s32.totalorder %s20, 1
    %p122 = por %p120, %p121
    %p123 = scmp.ne.s32.totalorder %s114, %s115
    %p124 = scmp.eq.s32.totalorder %s20, 0
    %p125 = por %p123, %p124
    %p126 = scmp.ne.s32.totalorder %s114, %s115
    %p127 = scmp.eq.s32.totalorder %s21, 1
    %p128 = por %p126, %p127
    %p130 = scmp.ne.s32.totalorder %s115, %s129
    %p131 = scmp.eq.s32.totalorder %s21, 0
    %p132 = por %p130, %p131
    %s134 = sadd.s32 %s133, 1
    %p137 = scmp.eq.s32.totalorder %s15, 1
    %p138 = scmp.ne.s32.totalorder %s133, %s135
    %p139 = scmp.eq.s32.totalorder %s15, 0
    %p140 = por %p138, %p139
    %p141 = scmp.ne.s32.totalorder %s133, %s135
    %p142 = scmp.eq.s32.totalorder %s20, 1
    %p143 = por %p141, %p142
    %p144 = scmp.ne.s32.totalorder %s135, %s136
    %p145 = scmp.eq.s32.totalorder %s20, 0
    %p146 = por %p144, %p145
    %p147 = scmp.ne.s32.totalorder %s135, %s136
    %p148 = scmp.eq.s32.totalorder %s21, 1
    %p149 = por %p147, %p148
    %p151 = scmp.ne.s32.totalorder %s136, %s150
    %p152 = scmp.eq.s32.totalorder %s21, 0
    %p153 = por %p151, %p152
    %s155 = sadd.s32 %s154, 1
    %p158 = scmp.eq.s32.totalorder %s15, 1
    %p159 = scmp.ne.s32.totalorder %s154, %s156
    %p160 = scmp.eq.s32.totalorder %s15, 0
    %p161 = por %p159, %p160
    %p162 = scmp.ne.s32.totalorder %s154, %s156
    %p163 = scmp.eq.s32.totalorder %s20, 1
    %p164 = por %p162, %p163
    %p165 = scmp.ne.s32.totalorder %s156, %s157
    %p166 = scmp.eq.s32.totalorder %s20, 0
    %p167 = por %p165, %p166
    %p168 = scmp.ne.s32.totalorder %s156, %s157
    %p169 = scmp.eq.s32.totalorder %s21, 1
    %p170 = por %p168, %p169
    %p172 = scmp.ne.s32.totalorder %s157, %s171
    %p173 = scmp.eq.s32.totalorder %s21, 0
    %p174 = por %p172, %p173
    %s176 = sadd.s32 %s175, 1
    %p179 = scmp.eq.s32.totalorder %s15, 1
    %p180 = scmp.ne.s32.totalorder %s175, %s177
    %p181 = scmp.eq.s32.totalorder %s15, 0
    %p182 = por %p180, %p181
    %p183 = scmp.ne.s32.totalorder %s175, %s177
    %p184 = scmp.eq.s32.totalorder %s20, 1
    %p185 = por %p183, %p184
    %p186 = scmp.ne.s32.totalorder %s177, %s178
    %p187 = scmp.eq.s32.totalorder %s20, 0
    %p188 = por %p186, %p187
    %p189 = scmp.ne.s32.totalorder %s177, %s178
    %p190 = scmp.eq.s32.totalorder %s21, 1
    %p191 = por %p189, %p190
    %p193 = scmp.ne.s32.totalorder %s178, %s192
    %p194 = scmp.eq.s32.totalorder %s21, 0
    %p195 = por %p193, %p194
    %s197 = sadd.s32 %s196, 1
    %p200 = scmp.eq.s32.totalorder %s15, 1
    %p201 = scmp.ne.s32.totalorder %s196, %s198
    %p202 = scmp.eq.s32.totalorder %s15, 0
    %p203 = por %p201, %p202
    %p204 = scmp.ne.s32.totalorder %s196, %s198
    %p205 = scmp.eq.s32.totalorder %s20, 1
    %p206 = por %p204, %p205
    %p207 = scmp.ne.s32.totalorder %s198, %s199
    %p208 = scmp.eq.s32.totalorder %s20, 0
    %p209 = por %p207, %p208
    %p210 = scmp.ne.s32.totalorder %s198, %s199
    %p211 = scmp.eq.s32.totalorder %s21, 1
    %p212 = por %p210, %p211
    %p214 = scmp.ne.s32.totalorder %s199, %s213
    %p215 = scmp.eq.s32.totalorder %s21, 0
    %p216 = por %p214, %p215
    %s217 = ssub.s32 %s15, %s22
    %p218 = scmp.eq.s32.totalorder %s217, 0
    %s220 = sadd.s32 %s219, 1
    %s221 = scalar_select %p218, %s219, %s220
    %p224 = pneg %p218
    %p225 = scmp.eq.s32.totalorder %s15, 1
    %p226 = por %p224, %p225
    %p227 = scmp.ne.s32.totalorder %s219, %s222
    %p228 = scmp.eq.s32.totalorder %s15, 0
    %p229 = por %p227, %p228
    %p230 = scmp.ne.s32.totalorder %s219, %s222
    %p231 = scmp.eq.s32.totalorder %s20, 1
    %p232 = por %p230, %p231
    %p233 = scmp.ne.s32.totalorder %s222, %s223
    %p234 = scmp.eq.s32.totalorder %s20, 0
    %p235 = por %p233, %p234
    %p236 = scmp.ne.s32.totalorder %s222, %s223
    %p237 = scmp.eq.s32.totalorder %s21, 1
    %p238 = por %p236, %p237
    %p240 = scmp.ne.s32.totalorder %s223, %s239
    %p241 = scmp.eq.s32.totalorder %s21, 0
    %p242 = por %p240, %p241
    %p243 = scmp.le.s32.totalorder 1, %s15
    %p244 = scmp.lt.s32.totalorder %s15, 3
    %p245 = pnand %p243, %p244
    %p246 = pneg %p245
    // Predicated region
    $region9: #{bottleneck_forward.1} parent=5 // pred_check
      _
    $region10: #{bottleneck_forward.1} parent=5 // pred_check_branch
      %248 = sbr.rel (%p245) target = $region12
    $region11: #{bottleneck_forward.1} parent=5 // pred_region
      %s249 = ssub.s32 %s15, 1
      // Predicated region
      $region13: #{bottleneck_forward.1} parent=11 // pred_check
        %p250 = pneg %p62
      $region14: #{bottleneck_forward.1} parent=11 // pred_check_branch
        %252 = sbr.rel (%p250) target = $region16
      $region15: #{bottleneck_forward.1} parent=11 // pred_region
        _
      $region16: #{bottleneck_forward.1} parent=11 // pred_fallthru
        _
      // Predicated region
      $region17: #{bottleneck_forward.1} parent=11 // pred_check
        %p253 = pneg %p83
      $region18: #{bottleneck_forward.1} parent=11 // pred_check_branch
        %255 = sbr.rel (%p253) target = $region20
      $region19: #{bottleneck_forward.1} parent=11 // pred_region
        _
      $region20: #{bottleneck_forward.1} parent=11 // pred_fallthru
        _
      // Predicated region
      $region21: #{bottleneck_forward.1} parent=11 // pred_check
        %p256 = pneg %p104
      $region22: #{bottleneck_forward.1} parent=11 // pred_check_branch
        %258 = sbr.rel (%p256) target = $region24
      $region23: #{bottleneck_forward.1} parent=11 // pred_region
        _
      $region24: #{bottleneck_forward.1} parent=11 // pred_fallthru
        _
      // Predicated region
      $region25: #{bottleneck_forward.1} parent=11 // pred_check
        %p259 = pneg %p125
      $region26: #{bottleneck_forward.1} parent=11 // pred_check_branch
        %261 = sbr.rel (%p259) target = $region28
      $region27: #{bottleneck_forward.1} parent=11 // pred_region
        _
      $region28: #{bottleneck_forward.1} parent=11 // pred_fallthru
        _
      // Predicated region
      $region29: #{bottleneck_forward.1} parent=11 // pred_check
        %p262 = pneg %p146
      $region30: #{bottleneck_forward.1} parent=11 // pred_check_branch
        %264 = sbr.rel (%p262) target = $region32
      $region31: #{bottleneck_forward.1} parent=11 // pred_region
        _
      $region32: #{bottleneck_forward.1} parent=11 // pred_fallthru
        _
      // Predicated region
      $region33: #{bottleneck_forward.1} parent=11 // pred_check
        %p265 = pneg %p167
      $region34: #{bottleneck_forward.1} parent=11 // pred_check_branch
        %267 = sbr.rel (%p265) target = $region36
      $region35: #{bottleneck_forward.1} parent=11 // pred_region
        _
      $region36: #{bottleneck_forward.1} parent=11 // pred_fallthru
        _
      // Predicated region
      $region37: #{bottleneck_forward.1} parent=11 // pred_check
        %p268 = pneg %p188
      $region38: #{bottleneck_forward.1} parent=11 // pred_check_branch
        %270 = sbr.rel (%p268) target = $region40
      $region39: #{bottleneck_forward.1} parent=11 // pred_region
        _
      $region40: #{bottleneck_forward.1} parent=11 // pred_fallthru
        _
      // Predicated region
      $region41: #{bottleneck_forward.1} parent=11 // pred_check
        %p271 = pneg %p209
      $region42: #{bottleneck_forward.1} parent=11 // pred_check_branch
        %273 = sbr.rel (%p271) target = $region44
      $region43: #{bottleneck_forward.1} parent=11 // pred_region
        _
      $region44: #{bottleneck_forward.1} parent=11 // pred_fallthru
        _
    $region12: #{bottleneck_forward.1} parent=5 // pred_fallthru
      _
    %p274 = scmp.lt.s32.totalorder %s15, 2
    // Predicated region
    $region45: #{bottleneck_forward.1} parent=5 // pred_check
      %p275 = pneg %p274
    $region46: #{bottleneck_forward.1} parent=5 // pred_check_branch
      %277 = sbr.rel (%p275) target = $region48
    $region47: #{bottleneck_forward.1} parent=5 // pred_region
      // Predicated region
      $region49: #{bottleneck_forward.1} parent=47 // pred_check
        %p278 = pneg %p35
      $region50: #{bottleneck_forward.1} parent=47 // pred_check_branch
        %280 = sbr.rel (%p278) target = $region52
      $region51: #{bottleneck_forward.1} parent=47 // pred_region
        %p281 = scmp.lt.s32.totalorder %s15, 1
        %s282 = scalar_select %p281, %s15, 1
        %s283 = smul.addr %s282, 3
        %s284 = smul.addr %s283, 8
        %s285 = scalar_lea.vmem %s0, %s284
      $region52: #{bottleneck_forward.1} parent=47 // pred_fallthru
        _
    $region48: #{bottleneck_forward.1} parent=5 // pred_fallthru
      _
    %p286 = scmp.le.s32.totalorder 1, %s15
    %p287 = scmp.lt.s32.totalorder %s15, 3
    %p288 = pnand %p286, %p287
    %p289 = pneg %p288
    // Predicated region
    $region53: #{bottleneck_forward.1} parent=5 // pred_check
      _
    $region54: #{bottleneck_forward.1} parent=5 // pred_check_branch
      %291 = sbr.rel (%p288) target = $region56
    $region55: #{bottleneck_forward.1} parent=5 // pred_region
      %s292 = ssub.s32 %s15, 1
      %p293 = scmp.lt.s32.totalorder %s20, 1
      %s294 = scalar_select %p293, %s20, 1
      %s295 = smul.addr %s294, 3
      %s296 = smul.addr %s295, 8
      %s297 = scalar_lea.vmem %s0, %s296
      %p298 = pneg %p41
      %p299 = pneg %p38
      %p300 = pneg %p62
      %p301 = pneg %p59
      %p302 = pneg %p83
      %p303 = pneg %p80
      %p304 = pneg %p104
      %p305 = pneg %p101
      %p306 = pneg %p125
      %p307 = pneg %p122
      %p308 = pneg %p146
      %p309 = pneg %p143
      %p310 = pneg %p167
      %p311 = pneg %p164
      %p312 = pneg %p188
      %p313 = pneg %p185
      %p314 = pneg %p209
      %p315 = pneg %p206
      %p316 = pneg %p235
      %p317 = pneg %p232
      %p318 = scmp.lt.s32.totalorder %s20, 1
      %s319 = scalar_select %p318, %s20, 1
      %s320 = smul.addr %s319, 2
      %s321 = smul.addr %s320, 8
      %s322 = scalar_lea.vmem %s9, %s321
      %p323 = scmp.lt.s32.totalorder %s20, 1
      %s324 = scalar_select %p323, %s20, 1
      %s325 = smul.addr %s324, 3
      %s326 = smul.addr %s325, 8
      %s327 = scalar_lea.vmem %s0, %s326
      %p328 = scmp.lt.s32.totalorder %s20, 1
      %s329 = scalar_select %p328, %s20, 1
      %s330 = smul.addr %s329, 2
      %s331 = smul.addr %s330, 8
      %s332 = scalar_lea.vmem %s9, %s331
      %v333 = vld [vmem:[%s327] sm:$0xff]
      %v334 = vld [vmem:[%s327 + $0x8] sm:$0xff]
      %v335 = vld [vmem:[%s327 + $0x10] sm:$0xf]
      %vm336 = vcmask 654336
      %337 = vst.msk [vmem:[#allocation2] sm:$0xff] %vm336, 0.0
      %338 = vst.msk [vmem:[#allocation2 + $0x8] sm:$0xff] %vm336, 0.0
      %vm339 = vcmask 650240
      %340 = vst.msk [vmem:[#allocation2 + $0x10] sm:$0xf] %vm339, 0.0
      %v341 = vld [vmem:[%s1] sm:$0xff]
      %v342 = vld [vmem:[%s1 + $0x8] sm:$0xff]
      %v343 = vld [vmem:[%s1 + $0x10] sm:$0xff]
      %v344 = vld [vmem:[%s1 + $0x18] sm:$0xff]
      %v345 = vld [vmem:[%s1 + $0x20] sm:$0xff]
      %v346 = vld [vmem:[%s1 + $0x28] sm:$0xff]
      %v347 = vld [vmem:[%s1 + $0x30] sm:$0xff]
      %v348 = vld [vmem:[%s1 + $0x38] sm:$0xff]
      %v349 = vld [vmem:[%s1 + $0x40] sm:$0xff]
      %v350 = vld [vmem:[%s1 + $0x48] sm:$0xff]
      %v351 = vld [vmem:[%s2] sm:$0x1]
      %v353 = vlaneseq
      %v354 = vshrl.u32 %v353, 7
      %v355 = vsub.s32 0, %v354
      %v356 = vrot.slane %v351, %v355
      %vm361 = vcmask 1045504
      %v362 = vrot.slane %v333, 2
      %v363 = vrot.slane %v334, 2
      %v364 = vsel %vm361, %v362, %v363
      %v365 = vrot.slane %v335, 2
      %v366 = vsel %vm361, %v363, %v365
      %v367 = vsel %vm336, %v364, 0
      %v369 = vsel %vm336, %v366, 0
      %371 = vmatprep.subr.mxu0 0.0
      %372 = vmatpush1.msra.mxu0 0.0
      %373 = vmatprep.subr.mxu0 0.0
      %374 = vmatpush1.msra.mxu0 0.0
      %375 = vmatprep.subr.mxu0 0.0
      %376 = vmatpush1.msra.mxu0 0.0
      %377 = vmatprep.subr.mxu0 0.0
      %378 = vmatpush1.msra.mxu0 0.0
      %379 = vmatprep.subr.mxu0 0.0
      %380 = vmatpush1.msra.mxu0 0.0
      %381 = vmatprep.subr.mxu0 0.0
      %382 = vmatpush1.msra.mxu0 0.0
      %383 = vmatprep.subr.mxu0 0.0
      %384 = vmatpush1.msra.mxu0 %v350
      %385 = vmatprep.subr.mxu0 0.0
      %386 = vmatpush1.msra.mxu0 %v349
      %387 = vmatprep.subr.mxu0 0.0
      %388 = vmatpush1.msra.mxu0 %v348
      %389 = vmatprep.subr.mxu0 0.0
      %390 = vmatpush1.msra.mxu0 %v347
      %391 = vmatprep.subr.mxu0 0.0
      %392 = vmatpush1.msra.mxu0 %v346
      %393 = vmatprep.subr.mxu0 0.0
      %394 = vmatpush1.msra.mxu0 %v345
      %395 = vmatprep.subr.mxu0 0.0
      %396 = vmatpush1.msra.mxu0 %v344
      %397 = vmatprep.subr.mxu0 0.0
      %398 = vmatpush1.msra.mxu0 %v343
      %399 = vmatprep.subr.mxu0 0.0
      %400 = vmatpush1.msra.mxu0 %v342
      %401 = vmatprep.subr.mxu0 0.0
      %402 = vmatpush1.msra.mxu0 %v341
      %403 = vmatprep.subr.mxu0 0.0
      %404 = vmatpush2.msra.mxu0 0.0
      %405 = vmatprep.subr.mxu0 0.0
      %406 = vmatpush2.msra.mxu0 0.0
      %407 = vmatprep.subr.mxu0 0.0
      %408 = vmatpush2.msra.mxu0 0.0
      %409 = vmatprep.subr.mxu0 0.0
      %410 = vmatpush2.msra.mxu0 0.0
      %411 = vmatprep.subr.mxu0 0.0
      %412 = vmatpush2.msra.mxu0 0.0
      %413 = vmatprep.subr.mxu0 0.0
      %414 = vmatpush2.msra.mxu0 0.0
      %415 = vmatprep.subr.mxu0 0.0
      %416 = vmatpush2.msra.mxu0 0.0
      %417 = vmatprep.subr.mxu0 0.0
      %418 = vmatpush2.msra.mxu0 0.0
      %419 = vmatprep.subr.mxu0 0.0
      %420 = vmatpush2.msra.mxu0 0.0
      %421 = vmatprep.subr.mxu0 0.0
      %422 = vmatpush2.msra.mxu0 0.0
      %423 = vmatprep.subr.mxu0 0.0
      %424 = vmatpush2.msra.mxu0 0.0
      %425 = vmatprep.subr.mxu0 0.0
      %426 = vmatpush2.msra.mxu0 0.0
      %427 = vmatprep.subr.mxu0 0.0
      %428 = vmatpush2.msra.mxu0 0.0
      %429 = vmatprep.subr.mxu0 0.0
      %430 = vmatpush2.msra.mxu0 0.0
      %431 = vmatprep.subr.mxu0 0.0
      %432 = vmatpush2.msra.mxu0 0.0
      %433 = vmatprep.subr.mxu0 0.0
      %434 = vmatpush2.msra.mxu0 0.0
      %435 = vmatprep.mubr.f32.mxu0 0.0
      %436 = vmatmul.mubr.f32.gmra.mxu0 %v367
      %v437 = vpop.f32.mrf.mxu0
      %v438 = vadd.f32 %v356, %v437
      %v439 = vpop.f32.mrf.mxu0
      %440 = vmatprep.mubr.f32.mxu0 0.0
      %441 = vmatmul.mubr.f32.gmra.mxu0 %v369
      %v442 = vpop.f32.mrf.mxu0
      %v443 = vadd.f32 %v356, %v442
      %v444 = vpop.f32.mrf.mxu0
      %445 = vdwg.mxu0
      %v446 = vmax.f32 %v438, 0.0
      %v447 = vmax.f32 %v443, 0.0
      %448 = vst.msk [vmem:[#allocation2 + $0x2] sm:$0xff] %vm336, %v446
      %449 = vst.msk [vmem:[#allocation2 + $0xa] sm:$0xff] %vm336, %v447
      %v450 = vld [vmem:[#allocation2] sm:$0xff]
      %v451 = vld [vmem:[#allocation2 + $0x8] sm:$0xff]
      %v452 = vld [vmem:[#allocation2 + $0x10] sm:$0xf]
      %v453 = vld [vmem:[%s3] sm:$0xff]
      %v454 = vld [vmem:[%s3 + $0x8] sm:$0xff]
      %v455 = vld [vmem:[%s3 + $0x10] sm:$0xff]
      %v456 = vld [vmem:[%s3 + $0x18] sm:$0xff]
      %v457 = vld [vmem:[%s3 + $0x20] sm:$0xff]
      %v458 = vld [vmem:[%s3 + $0x28] sm:$0xff]
      %v459 = vld [vmem:[%s3 + $0x30] sm:$0xff]
      %v460 = vld [vmem:[%s3 + $0x38] sm:$0xff]
      %v461 = vld [vmem:[%s3 + $0x40] sm:$0xff]
      %v462 = vld [vmem:[%s3 + $0x48] sm:$0xff]
      %s463 = scalar_lea.vmem %s3, 80
      %v464 = vld [vmem:[%s463] sm:$0xff]
      %v465 = vld [vmem:[%s463 + $0x8] sm:$0xff]
      %v466 = vld [vmem:[%s463 + $0x10] sm:$0xff]
      %v467 = vld [vmem:[%s463 + $0x18] sm:$0xff]
      %v468 = vld [vmem:[%s463 + $0x20] sm:$0xff]
      %v469 = vld [vmem:[%s463 + $0x28] sm:$0xff]
      %v470 = vld [vmem:[%s463 + $0x30] sm:$0xff]
      %v471 = vld [vmem:[%s463 + $0x38] sm:$0xff]
      %v472 = vld [vmem:[%s463 + $0x40] sm:$0xff]
      %v473 = vld [vmem:[%s463 + $0x48] sm:$0xff]
      %vm477 = vcmask 1046528
      %v478 = vrot.slane %v450, 1
      %v479 = vrot.slane %v451, 1
      %v480 = vsel %vm477, %v478, %v479
      %v481 = vrot.slane %v452, 1
      %v482 = vsel %vm477, %v479, %v481
      %v483 = vsel %vm336, %v480, 0
      %v485 = vsel %vm336, %v482, 0
      %487 = vmatprep.subr.mxu0 0.0
      %488 = vmatpush1.msra.mxu0 0.0
      %489 = vmatprep.subr.mxu0 0.0
      %490 = vmatpush1.msra.mxu0 0.0
      %491 = vmatprep.subr.mxu0 0.0
      %492 = vmatpush1.msra.mxu0 0.0
      %493 = vmatprep.subr.mxu0 0.0
      %494 = vmatpush1.msra.mxu0 0.0
      %495 = vmatprep.subr.mxu0 0.0
      %496 = vmatpush1.msra.mxu0 0.0
      %497 = vmatprep.subr.mxu0 0.0
      %498 = vmatpush1.msra.mxu0 0.0
      %499 = vmatprep.subr.mxu0 0.0
      %500 = vmatpush1.msra.mxu0 %v473
      %501 = vmatprep.subr.mxu0 0.0
      %502 = vmatpush1.msra.mxu0 %v472
      %503 = vmatprep.subr.mxu0 0.0
      %504 = vmatpush1.msra.mxu0 %v471
      %505 = vmatprep.subr.mxu0 0.0
      %506 = vmatpush1.msra.mxu0 %v470
      %507 = vmatprep.subr.mxu0 0.0
      %508 = vmatpush1.msra.mxu0 %v469
      %509 = vmatprep.subr.mxu0 0.0
      %510 = vmatpush1.msra.mxu0 %v468
      %511 = vmatprep.subr.mxu0 0.0
      %512 = vmatpush1.msra.mxu0 %v467
      %513 = vmatprep.subr.mxu0 0.0
      %514 = vmatpush1.msra.mxu0 %v466
      %515 = vmatprep.subr.mxu0 0.0
      %516 = vmatpush1.msra.mxu0 %v465
      %517 = vmatprep.subr.mxu0 0.0
      %518 = vmatpush1.msra.mxu0 %v464
      %519 = vmatprep.subr.mxu0 0.0
      %520 = vmatpush2.msra.mxu0 0.0
      %521 = vmatprep.subr.mxu0 0.0
      %522 = vmatpush2.msra.mxu0 0.0
      %523 = vmatprep.subr.mxu0 0.0
      %524 = vmatpush2.msra.mxu0 0.0
      %525 = vmatprep.subr.mxu0 0.0
      %526 = vmatpush2.msra.mxu0 0.0
      %527 = vmatprep.subr.mxu0 0.0
      %528 = vmatpush2.msra.mxu0 0.0
      %529 = vmatprep.subr.mxu0 0.0
      %530 = vmatpush2.msra.mxu0 0.0
      %531 = vmatprep.subr.mxu0 0.0
      %532 = vmatpush2.msra.mxu0 0.0
      %533 = vmatprep.subr.mxu0 0.0
      %534 = vmatpush2.msra.mxu0 0.0
      %535 = vmatprep.subr.mxu0 0.0
      %536 = vmatpush2.msra.mxu0 0.0
      %537 = vmatprep.subr.mxu0 0.0
      %538 = vmatpush2.msra.mxu0 0.0
      %539 = vmatprep.subr.mxu0 0.0
      %540 = vmatpush2.msra.mxu0 0.0
      %541 = vmatprep.subr.mxu0 0.0
      %542 = vmatpush2.msra.mxu0 0.0
      %543 = vmatprep.subr.mxu0 0.0
      %544 = vmatpush2.msra.mxu0 0.0
      %545 = vmatprep.subr.mxu0 0.0
      %546 = vmatpush2.msra.mxu0 0.0
      %547 = vmatprep.subr.mxu0 0.0
      %548 = vmatpush2.msra.mxu0 0.0
      %549 = vmatprep.subr.mxu0 0.0
      %550 = vmatpush2.msra.mxu0 0.0
      %551 = vmatprep.mubr.f32.mxu0 0.0
      %552 = vmatmul.mubr.f32.gmra.mxu0 %v483
      %v553 = vpop.f32.mrf.mxu0
      %v554 = vadd.f32 0.0, %v553
      %v555 = vpop.f32.mrf.mxu0
      %556 = vmatprep.mubr.f32.mxu0 0.0
      %557 = vmatmul.mubr.f32.gmra.mxu0 %v485
      %v558 = vpop.f32.mrf.mxu0
      %v559 = vadd.f32 0.0, %v558
      %v560 = vpop.f32.mrf.mxu0
      %561 = vdwg.mxu0
      %v562 = vsel %vm336, %v450, 0
      %v564 = vsel %vm336, %v451, 0
      %566 = vmatprep.subr.mxu0 0.0
      %567 = vmatpush1.msra.mxu0 0.0
      %568 = vmatprep.subr.mxu0 0.0
      %569 = vmatpush1.msra.mxu0 0.0
      %570 = vmatprep.subr.mxu0 0.0
      %571 = vmatpush1.msra.mxu0 0.0
      %572 = vmatprep.subr.mxu0 0.0
      %573 = vmatpush1.msra.mxu0 0.0
      %574 = vmatprep.subr.mxu0 0.0
      %575 = vmatpush1.msra.mxu0 0.0
      %576 = vmatprep.subr.mxu0 0.0
      %577 = vmatpush1.msra.mxu0 0.0
      %578 = vmatprep.subr.mxu0 0.0
      %579 = vmatpush1.msra.mxu0 %v462
      %580 = vmatprep.subr.mxu0 0.0
      %581 = vmatpush1.msra.mxu0 %v461
      %582 = vmatprep.subr.mxu0 0.0
      %583 = vmatpush1.msra.mxu0 %v460
      %584 = vmatprep.subr.mxu0 0.0
      %585 = vmatpush1.msra.mxu0 %v459
      %586 = vmatprep.subr.mxu0 0.0
      %587 = vmatpush1.msra.mxu0 %v458
      %588 = vmatprep.subr.mxu0 0.0
      %589 = vmatpush1.msra.mxu0 %v457
      %590 = vmatprep.subr.mxu0 0.0
      %591 = vmatpush1.msra.mxu0 %v456
      %592 = vmatprep.subr.mxu0 0.0
      %593 = vmatpush1.msra.mxu0 %v455
      %594 = vmatprep.subr.mxu0 0.0
      %595 = vmatpush1.msra.mxu0 %v454
      %596 = vmatprep.subr.mxu0 0.0
      %597 = vmatpush1.msra.mxu0 %v453
      %598 = vmatprep.subr.mxu0 0.0
      %599 = vmatpush2.msra.mxu0 0.0
      %600 = vmatprep.subr.mxu0 0.0
      %601 = vmatpush2.msra.mxu0 0.0
      %602 = vmatprep.subr.mxu0 0.0
      %603 = vmatpush2.msra.mxu0 0.0
      %604 = vmatprep.subr.mxu0 0.0
      %605 = vmatpush2.msra.mxu0 0.0
      %606 = vmatprep.subr.mxu0 0.0
      %607 = vmatpush2.msra.mxu0 0.0
      %608 = vmatprep.subr.mxu0 0.0
      %609 = vmatpush2.msra.mxu0 0.0
      %610 = vmatprep.subr.mxu0 0.0
      %611 = vmatpush2.msra.mxu0 0.0
      %612 = vmatprep.subr.mxu0 0.0
      %613 = vmatpush2.msra.mxu0 0.0
      %614 = vmatprep.subr.mxu0 0.0
      %615 = vmatpush2.msra.mxu0 0.0
      %616 = vmatprep.subr.mxu0 0.0
      %617 = vmatpush2.msra.mxu0 0.0
      %618 = vmatprep.subr.mxu0 0.0
      %619 = vmatpush2.msra.mxu0 0.0
      %620 = vmatprep.subr.mxu0 0.0
      %621 = vmatpush2.msra.mxu0 0.0
      %622 = vmatprep.subr.mxu0 0.0
      %623 = vmatpush2.msra.mxu0 0.0
      %624 = vmatprep.subr.mxu0 0.0
      %625 = vmatpush2.msra.mxu0 0.0
      %626 = vmatprep.subr.mxu0 0.0
      %627 = vmatpush2.msra.mxu0 0.0
      %628 = vmatprep.subr.mxu0 0.0
      %629 = vmatpush2.msra.mxu0 0.0
      %630 = vmatprep.mubr.f32.mxu0 0.0
      %631 = vmatmul.mubr.f32.gmra.mxu0 %v562
      %v632 = vpop.f32.mrf.mxu0
      %v633 = vadd.f32 %v554, %v632
      %v634 = vpop.f32.mrf.mxu0
      %635 = vmatprep.mubr.f32.mxu0 0.0
      %636 = vmatmul.mubr.f32.gmra.mxu0 %v564
      %v637 = vpop.f32.mrf.mxu0
      %v638 = vadd.f32 %v559, %v637
      %v639 = vpop.f32.mrf.mxu0
      %640 = vdwg.mxu0
      %s641 = scalar_lea.vmem %s3, 160
      %v642 = vld [vmem:[%s641] sm:$0xff]
      %v643 = vld [vmem:[%s641 + $0x8] sm:$0xff]
      %v644 = vld [vmem:[%s641 + $0x10] sm:$0xff]
      %v645 = vld [vmem:[%s641 + $0x18] sm:$0xff]
      %v646 = vld [vmem:[%s641 + $0x20] sm:$0xff]
      %v647 = vld [vmem:[%s641 + $0x28] sm:$0xff]
      %v648 = vld [vmem:[%s641 + $0x30] sm:$0xff]
      %v649 = vld [vmem:[%s641 + $0x38] sm:$0xff]
      %v650 = vld [vmem:[%s641 + $0x40] sm:$0xff]
      %v651 = vld [vmem:[%s641 + $0x48] sm:$0xff]
      %v652 = vrot.slane %v450, 2
      %v653 = vrot.slane %v451, 2
      %v654 = vsel %vm361, %v652, %v653
      %v655 = vrot.slane %v452, 2
      %v656 = vsel %vm361, %v653, %v655
      %v657 = vsel %vm336, %v654, 0
      %v659 = vsel %vm336, %v656, 0
      %661 = vmatprep.subr.mxu0 0.0
      %662 = vmatpush1.msra.mxu0 0.0
      %663 = vmatprep.subr.mxu0 0.0
      %664 = vmatpush1.msra.mxu0 0.0
      %665 = vmatprep.subr.mxu0 0.0
      %666 = vmatpush1.msra.mxu0 0.0
      %667 = vmatprep.subr.mxu0 0.0
      %668 = vmatpush1.msra.mxu0 0.0
      %669 = vmatprep.subr.mxu0 0.0
      %670 = vmatpush1.msra.mxu0 0.0
      %671 = vmatprep.subr.mxu0 0.0
      %672 = vmatpush1.msra.mxu0 0.0
      %673 = vmatprep.subr.mxu0 0.0
      %674 = vmatpush1.msra.mxu0 %v651
      %675 = vmatprep.subr.mxu0 0.0
      %676 = vmatpush1.msra.mxu0 %v650
      %677 = vmatprep.subr.mxu0 0.0
      %678 = vmatpush1.msra.mxu0 %v649
      %679 = vmatprep.subr.mxu0 0.0
      %680 = vmatpush1.msra.mxu0 %v648
      %681 = vmatprep.subr.mxu0 0.0
      %682 = vmatpush1.msra.mxu0 %v647
      %683 = vmatprep.subr.mxu0 0.0
      %684 = vmatpush1.msra.mxu0 %v646
      %685 = vmatprep.subr.mxu0 0.0
      %686 = vmatpush1.msra.mxu0 %v645
      %687 = vmatprep.subr.mxu0 0.0
      %688 = vmatpush1.msra.mxu0 %v644
      %689 = vmatprep.subr.mxu0 0.0
      %690 = vmatpush1.msra.mxu0 %v643
      %691 = vmatprep.subr.mxu0 0.0
      %692 = vmatpush1.msra.mxu0 %v642
      %693 = vmatprep.subr.mxu0 0.0
      %694 = vmatpush2.msra.mxu0 0.0
      %695 = vmatprep.subr.mxu0 0.0
      %696 = vmatpush2.msra.mxu0 0.0
      %697 = vmatprep.subr.mxu0 0.0
      %698 = vmatpush2.msra.mxu0 0.0
      %699 = vmatprep.subr.mxu0 0.0
      %700 = vmatpush2.msra.mxu0 0.0
      %701 = vmatprep.subr.mxu0 0.0
      %702 = vmatpush2.msra.mxu0 0.0
      %703 = vmatprep.subr.mxu0 0.0
      %704 = vmatpush2.msra.mxu0 0.0
      %705 = vmatprep.subr.mxu0 0.0
      %706 = vmatpush2.msra.mxu0 0.0
      %707 = vmatprep.subr.mxu0 0.0
      %708 = vmatpush2.msra.mxu0 0.0
      %709 = vmatprep.subr.mxu0 0.0
      %710 = vmatpush2.msra.mxu0 0.0
      %711 = vmatprep.subr.mxu0 0.0
      %712 = vmatpush2.msra.mxu0 0.0
      %713 = vmatprep.subr.mxu0 0.0
      %714 = vmatpush2.msra.mxu0 0.0
      %715 = vmatprep.subr.mxu0 0.0
      %716 = vmatpush2.msra.mxu0 0.0
      %717 = vmatprep.subr.mxu0 0.0
      %718 = vmatpush2.msra.mxu0 0.0
      %719 = vmatprep.subr.mxu0 0.0
      %720 = vmatpush2.msra.mxu0 0.0
      %721 = vmatprep.subr.mxu0 0.0
      %722 = vmatpush2.msra.mxu0 0.0
      %723 = vmatprep.subr.mxu0 0.0
      %724 = vmatpush2.msra.mxu0 0.0
      %725 = vmatprep.mubr.f32.mxu0 0.0
      %726 = vmatmul.mubr.f32.gmra.mxu0 %v657
      %v727 = vpop.f32.mrf.mxu0
      %v728 = vadd.f32 0.0, %v727
      %v729 = vpop.f32.mrf.mxu0
      %730 = vmatprep.mubr.f32.mxu0 0.0
      %731 = vmatmul.mubr.f32.gmra.mxu0 %v659
      %v732 = vpop.f32.mrf.mxu0
      %v733 = vadd.f32 0.0, %v732
      %v734 = vpop.f32.mrf.mxu0
      %735 = vdwg.mxu0
      %v736 = vadd.f32 %v633, %v728
      %v737 = vadd.f32 %v638, %v733
      %s738 = scalar_lea.vmem %s3, 240
      %v739 = vld [vmem:[%s738] sm:$0xff]
      %v740 = vld [vmem:[%s738 + $0x8] sm:$0xff]
      %v741 = vld [vmem:[%s738 + $0x10] sm:$0xff]
      %v742 = vld [vmem:[%s738 + $0x18] sm:$0xff]
      %v743 = vld [vmem:[%s738 + $0x20] sm:$0xff]
      %v744 = vld [vmem:[%s738 + $0x28] sm:$0xff]
      %v745 = vld [vmem:[%s738 + $0x30] sm:$0xff]
      %v746 = vld [vmem:[%s738 + $0x38] sm:$0xff]
      %v747 = vld [vmem:[%s738 + $0x40] sm:$0xff]
      %v748 = vld [vmem:[%s738 + $0x48] sm:$0xff]
      %vm749 = vcmask 1044480
      %v750 = vrot.slane %v450, 3
      %v751 = vrot.slane %v451, 3
      %v752 = vsel %vm749, %v750, %v751
      %v753 = vrot.slane %v452, 3
      %v754 = vsel %vm749, %v751, %v753
      %v755 = vsel %vm336, %v752, 0
      %v757 = vsel %vm336, %v754, 0
      %759 = vmatprep.subr.mxu0 0.0
      %760 = vmatpush1.msra.mxu0 0.0
      %761 = vmatprep.subr.mxu0 0.0
      %762 = vmatpush1.msra.mxu0 0.0
      %763 = vmatprep.subr.mxu0 0.0
      %764 = vmatpush1.msra.mxu0 0.0
      %765 = vmatprep.subr.mxu0 0.0
      %766 = vmatpush1.msra.mxu0 0.0
      %767 = vmatprep.subr.mxu0 0.0
      %768 = vmatpush1.msra.mxu0 0.0
      %769 = vmatprep.subr.mxu0 0.0
      %770 = vmatpush1.msra.mxu0 0.0
      %771 = vmatprep.subr.mxu0 0.0
      %772 = vmatpush1.msra.mxu0 %v748
      %773 = vmatprep.subr.mxu0 0.0
      %774 = vmatpush1.msra.mxu0 %v747
      %775 = vmatprep.subr.mxu0 0.0
      %776 = vmatpush1.msra.mxu0 %v746
      %777 = vmatprep.subr.mxu0 0.0
      %778 = vmatpush1.msra.mxu0 %v745
      %779 = vmatprep.subr.mxu0 0.0
      %780 = vmatpush1.msra.mxu0 %v744
      %781 = vmatprep.subr.mxu0 0.0
      %782 = vmatpush1.msra.mxu0 %v743
      %783 = vmatprep.subr.mxu0 0.0
      %784 = vmatpush1.msra.mxu0 %v742
      %785 = vmatprep.subr.mxu0 0.0
      %786 = vmatpush1.msra.mxu0 %v741
      %787 = vmatprep.subr.mxu0 0.0
      %788 = vmatpush1.msra.mxu0 %v740
      %789 = vmatprep.subr.mxu0 0.0
      %790 = vmatpush1.msra.mxu0 %v739
      %791 = vmatprep.subr.mxu0 0.0
      %792 = vmatpush2.msra.mxu0 0.0
      %793 = vmatprep.subr.mxu0 0.0
      %794 = vmatpush2.msra.mxu0 0.0
      %795 = vmatprep.subr.mxu0 0.0
      %796 = vmatpush2.msra.mxu0 0.0
      %797 = vmatprep.subr.mxu0 0.0
      %798 = vmatpush2.msra.mxu0 0.0
      %799 = vmatprep.subr.mxu0 0.0
      %800 = vmatpush2.msra.mxu0 0.0
      %801 = vmatprep.subr.mxu0 0.0
      %802 = vmatpush2.msra.mxu0 0.0
      %803 = vmatprep.subr.mxu0 0.0
      %804 = vmatpush2.msra.mxu0 0.0
      %805 = vmatprep.subr.mxu0 0.0
      %806 = vmatpush2.msra.mxu0 0.0
      %807 = vmatprep.subr.mxu0 0.0
      %808 = vmatpush2.msra.mxu0 0.0
      %809 = vmatprep.subr.mxu0 0.0
      %810 = vmatpush2.msra.mxu0 0.0
      %811 = vmatprep.subr.mxu0 0.0
      %812 = vmatpush2.msra.mxu0 0.0
      %813 = vmatprep.subr.mxu0 0.0
      %814 = vmatpush2.msra.mxu0 0.0
      %815 = vmatprep.subr.mxu0 0.0
      %816 = vmatpush2.msra.mxu0 0.0
      %817 = vmatprep.subr.mxu0 0.0
      %818 = vmatpush2.msra.mxu0 0.0
      %819 = vmatprep.subr.mxu0 0.0
      %820 = vmatpush2.msra.mxu0 0.0
      %821 = vmatprep.subr.mxu0 0.0
      %822 = vmatpush2.msra.mxu0 0.0
      %823 = vmatprep.mubr.f32.mxu0 0.0
      %824 = vmatmul.mubr.f32.gmra.mxu0 %v755
      %v825 = vpop.f32.mrf.mxu0
      %v826 = vadd.f32 0.0, %v825
      %v827 = vpop.f32.mrf.mxu0
      %828 = vmatprep.mubr.f32.mxu0 0.0
      %829 = vmatmul.mubr.f32.gmra.mxu0 %v757
      %v830 = vpop.f32.mrf.mxu0
      %v831 = vadd.f32 0.0, %v830
      %v832 = vpop.f32.mrf.mxu0
      %833 = vdwg.mxu0
      %v834 = vadd.f32 %v736, %v826
      %v835 = vadd.f32 %v737, %v831
      %s836 = scalar_lea.vmem %s3, 320
      %v837 = vld [vmem:[%s836] sm:$0xff]
      %v838 = vld [vmem:[%s836 + $0x8] sm:$0xff]
      %v839 = vld [vmem:[%s836 + $0x10] sm:$0xff]
      %v840 = vld [vmem:[%s836 + $0x18] sm:$0xff]
      %v841 = vld [vmem:[%s836 + $0x20] sm:$0xff]
      %v842 = vld [vmem:[%s836 + $0x28] sm:$0xff]
      %v843 = vld [vmem:[%s836 + $0x30] sm:$0xff]
      %v844 = vld [vmem:[%s836 + $0x38] sm:$0xff]
      %v845 = vld [vmem:[%s836 + $0x40] sm:$0xff]
      %v846 = vld [vmem:[%s836 + $0x48] sm:$0xff]
      %vm847 = vcmask 1043456
      %v848 = vrot.slane %v450, 4
      %v849 = vrot.slane %v451, 4
      %v850 = vsel %vm847, %v848, %v849
      %v851 = vrot.slane %v452, 4
      %v852 = vsel %vm847, %v849, %v851
      %v853 = vsel %vm336, %v850, 0
      %v855 = vsel %vm336, %v852, 0
      %857 = vmatprep.subr.mxu0 0.0
      %858 = vmatpush1.msra.mxu0 0.0
      %859 = vmatprep.subr.mxu0 0.0
      %860 = vmatpush1.msra.mxu0 0.0
      %861 = vmatprep.subr.mxu0 0.0
      %862 = vmatpush1.msra.mxu0 0.0
      %863 = vmatprep.subr.mxu0 0.0
      %864 = vmatpush1.msra.mxu0 0.0
      %865 = vmatprep.subr.mxu0 0.0
      %866 = vmatpush1.msra.mxu0 0.0
      %867 = vmatprep.subr.mxu0 0.0
      %868 = vmatpush1.msra.mxu0 0.0
      %869 = vmatprep.subr.mxu0 0.0
      %870 = vmatpush1.msra.mxu0 %v846
      %871 = vmatprep.subr.mxu0 0.0
      %872 = vmatpush1.msra.mxu0 %v845
      %873 = vmatprep.subr.mxu0 0.0
      %874 = vmatpush1.msra.mxu0 %v844
      %875 = vmatprep.subr.mxu0 0.0
      %876 = vmatpush1.msra.mxu0 %v843
      %877 = vmatprep.subr.mxu0 0.0
      %878 = vmatpush1.msra.mxu0 %v842
      %879 = vmatprep.subr.mxu0 0.0
      %880 = vmatpush1.msra.mxu0 %v841
      %881 = vmatprep.subr.mxu0 0.0
      %882 = vmatpush1.msra.mxu0 %v840
      %883 = vmatprep.subr.mxu0 0.0
      %884 = vmatpush1.msra.mxu0 %v839
      %885 = vmatprep.subr.mxu0 0.0
      %886 = vmatpush1.msra.mxu0 %v838
      %887 = vmatprep.subr.mxu0 0.0
      %888 = vmatpush1.msra.mxu0 %v837
      %889 = vmatprep.subr.mxu0 0.0
      %890 = vmatpush2.msra.mxu0 0.0
      %891 = vmatprep.subr.mxu0 0.0
      %892 = vmatpush2.msra.mxu0 0.0
      %893 = vmatprep.subr.mxu0 0.0
      %894 = vmatpush2.msra.mxu0 0.0
      %895 = vmatprep.subr.mxu0 0.0
      %896 = vmatpush2.msra.mxu0 0.0
      %897 = vmatprep.subr.mxu0 0.0
      %898 = vmatpush2.msra.mxu0 0.0
      %899 = vmatprep.subr.mxu0 0.0
      %900 = vmatpush2.msra.mxu0 0.0
      %901 = vmatprep.subr.mxu0 0.0
      %902 = vmatpush2.msra.mxu0 0.0
      %903 = vmatprep.subr.mxu0 0.0
      %904 = vmatpush2.msra.mxu0 0.0
      %905 = vmatprep.subr.mxu0 0.0
      %906 = vmatpush2.msra.mxu0 0.0
      %907 = vmatprep.subr.mxu0 0.0
      %908 = vmatpush2.msra.mxu0 0.0
      %909 = vmatprep.subr.mxu0 0.0
      %910 = vmatpush2.msra.mxu0 0.0
      %911 = vmatprep.subr.mxu0 0.0
      %912 = vmatpush2.msra.mxu0 0.0
      %913 = vmatprep.subr.mxu0 0.0
      %914 = vmatpush2.msra.mxu0 0.0
      %915 = vmatprep.subr.mxu0 0.0
      %916 = vmatpush2.msra.mxu0 0.0
      %917 = vmatprep.subr.mxu0 0.0
      %918 = vmatpush2.msra.mxu0 0.0
      %919 = vmatprep.subr.mxu0 0.0
      %920 = vmatpush2.msra.mxu0 0.0
      %921 = vmatprep.mubr.f32.mxu0 0.0
      %922 = vmatmul.mubr.f32.gmra.mxu0 %v853
      %v923 = vpop.f32.mrf.mxu0
      %v924 = vadd.f32 0.0, %v923
      %v925 = vpop.f32.mrf.mxu0
      %926 = vmatprep.mubr.f32.mxu0 0.0
      %927 = vmatmul.mubr.f32.gmra.mxu0 %v855
      %v928 = vpop.f32.mrf.mxu0
      %v929 = vadd.f32 0.0, %v928
      %v930 = vpop.f32.mrf.mxu0
      %931 = vdwg.mxu0
      %v932 = vadd.f32 %v834, %v924
      %v933 = vadd.f32 %v835, %v929
      %v934 = vld [vmem:[%s4] sm:$0x1]
      %v936 = vlaneseq
      %v937 = vshrl.u32 %v936, 7
      %v938 = vsub.s32 0, %v937
      %v939 = vrot.slane %v934, %v938
      %v941 = vadd.f32 %v932, %v939
      %v942 = vadd.f32 %v933, %v939
      %v943 = vmax.f32 %v941, 0.0
      %v944 = vmax.f32 %v942, 0.0
      %v945 = vld [vmem:[%s5] sm:$0xff]
      %v946 = vld [vmem:[%s5 + $0x8] sm:$0xff]
      %v947 = vld [vmem:[%s5 + $0x10] sm:$0xff]
      %v948 = vld [vmem:[%s5 + $0x18] sm:$0xff]
      %v949 = vld [vmem:[%s5 + $0x20] sm:$0xff]
      %v950 = vld [vmem:[%s5 + $0x28] sm:$0xff]
      %v951 = vld [vmem:[%s5 + $0x30] sm:$0xff]
      %v952 = vld [vmem:[%s5 + $0x38] sm:$0xff]
      %v953 = vld [vmem:[%s6] sm:$0x1]
      %v955 = vlaneseq
      %v956 = vshrl.u32 %v955, 7
      %v957 = vsub.s32 0, %v956
      %v958 = vrot.slane %v953, %v957
      %vm960 = vcmask 523264
      %v962 = vsel %vm960, %v943, 0
      %v965 = vsel %vm960, %v944, 0
      %967 = vmatprep.subr.mxu0 0.0
      %968 = vmatpush1.msra.mxu0 0.0
      %969 = vmatprep.subr.mxu0 0.0
      %970 = vmatpush1.msra.mxu0 0.0
      %971 = vmatprep.subr.mxu0 0.0
      %972 = vmatpush1.msra.mxu0 0.0
      %973 = vmatprep.subr.mxu0 0.0
      %974 = vmatpush1.msra.mxu0 0.0
      %975 = vmatprep.subr.mxu0 0.0
      %976 = vmatpush1.msra.mxu0 0.0
      %977 = vmatprep.subr.mxu0 0.0
      %978 = vmatpush1.msra.mxu0 0.0
      %979 = vmatprep.subr.mxu0 0.0
      %980 = vmatpush1.msra.mxu0 0.0
      %981 = vmatprep.subr.mxu0 0.0
      %982 = vmatpush1.msra.mxu0 0.0
      %983 = vmatprep.subr.mxu0 0.0
      %984 = vmatpush1.msra.mxu0 %v952
      %985 = vmatprep.subr.mxu0 0.0
      %986 = vmatpush1.msra.mxu0 %v951
      %987 = vmatprep.subr.mxu0 0.0
      %988 = vmatpush1.msra.mxu0 %v950
      %989 = vmatprep.subr.mxu0 0.0
      %990 = vmatpush1.msra.mxu0 %v949
      %991 = vmatprep.subr.mxu0 0.0
      %992 = vmatpush1.msra.mxu0 %v948
      %993 = vmatprep.subr.mxu0 0.0
      %994 = vmatpush1.msra.mxu0 %v947
      %995 = vmatprep.subr.mxu0 0.0
      %996 = vmatpush1.msra.mxu0 %v946
      %997 = vmatprep.subr.mxu0 0.0
      %998 = vmatpush1.msra.mxu0 %v945
      %999 = vmatprep.subr.mxu0 0.0
      %1000 = vmatpush2.msra.mxu0 0.0
      %1001 = vmatprep.subr.mxu0 0.0
      %1002 = vmatpush2.msra.mxu0 0.0
      %1003 = vmatprep.subr.mxu0 0.0
      %1004 = vmatpush2.msra.mxu0 0.0
      %1005 = vmatprep.subr.mxu0 0.0
      %1006 = vmatpush2.msra.mxu0 0.0
      %1007 = vmatprep.subr.mxu0 0.0
      %1008 = vmatpush2.msra.mxu0 0.0
      %1009 = vmatprep.subr.mxu0 0.0
      %1010 = vmatpush2.msra.mxu0 0.0
      %1011 = vmatprep.subr.mxu0 0.0
      %1012 = vmatpush2.msra.mxu0 0.0
      %1013 = vmatprep.subr.mxu0 0.0
      %1014 = vmatpush2.msra.mxu0 0.0
      %1015 = vmatprep.subr.mxu0 0.0
      %1016 = vmatpush2.msra.mxu0 0.0
      %1017 = vmatprep.subr.mxu0 0.0
      %1018 = vmatpush2.msra.mxu0 0.0
      %1019 = vmatprep.subr.mxu0 0.0
      %1020 = vmatpush2.msra.mxu0 0.0
      %1021 = vmatprep.subr.mxu0 0.0
      %1022 = vmatpush2.msra.mxu0 0.0
      %1023 = vmatprep.subr.mxu0 0.0
      %1024 = vmatpush2.msra.mxu0 0.0
      %1025 = vmatprep.subr.mxu0 0.0
      %1026 = vmatpush2.msra.mxu0 0.0
      %1027 = vmatprep.subr.mxu0 0.0
      %1028 = vmatpush2.msra.mxu0 0.0
      %1029 = vmatprep.subr.mxu0 0.0
      %1030 = vmatpush2.msra.mxu0 0.0
      %1031 = vmatprep.mubr.f32.mxu0 0.0
      %1032 = vmatmul.mubr.f32.gmra.mxu0 %v962
      %v1033 = vpop.f32.mrf.mxu0
      %v1034 = vadd.f32 %v958, %v1033
      %v1035 = vpop.f32.mrf.mxu0
      %1036 = vmatprep.mubr.f32.mxu0 0.0
      %1037 = vmatmul.mubr.f32.gmra.mxu0 %v965
      %v1038 = vpop.f32.mrf.mxu0
      %v1039 = vadd.f32 %v958, %v1038
      %v1040 = vpop.f32.mrf.mxu0
      %1041 = vdwg.mxu0
      %v1042 = vld [vmem:[%s7] sm:$0xff]
      %v1043 = vld [vmem:[%s7 + $0x8] sm:$0xff]
      %v1044 = vld [vmem:[%s7 + $0x10] sm:$0xff]
      %v1045 = vld [vmem:[%s7 + $0x18] sm:$0xff]
      %v1046 = vld [vmem:[%s7 + $0x20] sm:$0xff]
      %v1047 = vld [vmem:[%s7 + $0x28] sm:$0xff]
      %v1048 = vld [vmem:[%s7 + $0x30] sm:$0xff]
      %v1049 = vld [vmem:[%s7 + $0x38] sm:$0xff]
      %v1050 = vld [vmem:[%s7 + $0x40] sm:$0xff]
      %v1051 = vld [vmem:[%s7 + $0x48] sm:$0xff]
      %s1052 = scalar_lea.vmem %s7, 80
      %v1053 = vld [vmem:[%s1052] sm:$0xff]
      %v1054 = vld [vmem:[%s1052 + $0x8] sm:$0xff]
      %v1055 = vld [vmem:[%s1052 + $0x10] sm:$0xff]
      %v1056 = vld [vmem:[%s1052 + $0x18] sm:$0xff]
      %v1057 = vld [vmem:[%s1052 + $0x20] sm:$0xff]
      %v1058 = vld [vmem:[%s1052 + $0x28] sm:$0xff]
      %v1059 = vld [vmem:[%s1052 + $0x30] sm:$0xff]
      %v1060 = vld [vmem:[%s1052 + $0x38] sm:$0xff]
      %v1061 = vld [vmem:[%s1052 + $0x40] sm:$0xff]
      %v1062 = vld [vmem:[%s1052 + $0x48] sm:$0xff]
      %1063 = vmatprep.subr.mxu0 0.0
      %1064 = vmatpush1.msra.mxu0 0.0
      %1065 = vmatprep.subr.mxu0 0.0
      %1066 = vmatpush1.msra.mxu0 0.0
      %1067 = vmatprep.subr.mxu0 0.0
      %1068 = vmatpush1.msra.mxu0 0.0
      %1069 = vmatprep.subr.mxu0 0.0
      %1070 = vmatpush1.msra.mxu0 0.0
      %1071 = vmatprep.subr.mxu0 0.0
      %1072 = vmatpush1.msra.mxu0 0.0
      %1073 = vmatprep.subr.mxu0 0.0
      %1074 = vmatpush1.msra.mxu0 0.0
      %1075 = vmatprep.subr.mxu0 0.0
      %1076 = vmatpush1.msra.mxu0 %v1062
      %1077 = vmatprep.subr.mxu0 0.0
      %1078 = vmatpush1.msra.mxu0 %v1061
      %1079 = vmatprep.subr.mxu0 0.0
      %1080 = vmatpush1.msra.mxu0 %v1060
      %1081 = vmatprep.subr.mxu0 0.0
      %1082 = vmatpush1.msra.mxu0 %v1059
      %1083 = vmatprep.subr.mxu0 0.0
      %1084 = vmatpush1.msra.mxu0 %v1058
      %1085 = vmatprep.subr.mxu0 0.0
      %1086 = vmatpush1.msra.mxu0 %v1057
      %1087 = vmatprep.subr.mxu0 0.0
      %1088 = vmatpush1.msra.mxu0 %v1056
      %1089 = vmatprep.subr.mxu0 0.0
      %1090 = vmatpush1.msra.mxu0 %v1055
      %1091 = vmatprep.subr.mxu0 0.0
      %1092 = vmatpush1.msra.mxu0 %v1054
      %1093 = vmatprep.subr.mxu0 0.0
      %1094 = vmatpush1.msra.mxu0 %v1053
      %1095 = vmatprep.subr.mxu0 0.0
      %1096 = vmatpush2.msra.mxu0 0.0
      %1097 = vmatprep.subr.mxu0 0.0
      %1098 = vmatpush2.msra.mxu0 0.0
      %1099 = vmatprep.subr.mxu0 0.0
      %1100 = vmatpush2.msra.mxu0 0.0
      %1101 = vmatprep.subr.mxu0 0.0
      %1102 = vmatpush2.msra.mxu0 0.0
      %1103 = vmatprep.subr.mxu0 0.0
      %1104 = vmatpush2.msra.mxu0 0.0
      %1105 = vmatprep.subr.mxu0 0.0
      %1106 = vmatpush2.msra.mxu0 0.0
      %1107 = vmatprep.subr.mxu0 0.0
      %1108 = vmatpush2.msra.mxu0 0.0
      %1109 = vmatprep.subr.mxu0 0.0
      %1110 = vmatpush2.msra.mxu0 0.0
      %1111 = vmatprep.subr.mxu0 0.0
      %1112 = vmatpush2.msra.mxu0 0.0
      %1113 = vmatprep.subr.mxu0 0.0
      %1114 = vmatpush2.msra.mxu0 0.0
      %1115 = vmatprep.subr.mxu0 0.0
      %1116 = vmatpush2.msra.mxu0 0.0
      %1117 = vmatprep.subr.mxu0 0.0
      %1118 = vmatpush2.msra.mxu0 0.0
      %1119 = vmatprep.subr.mxu0 0.0
      %1120 = vmatpush2.msra.mxu0 0.0
      %1121 = vmatprep.subr.mxu0 0.0
      %1122 = vmatpush2.msra.mxu0 0.0
      %1123 = vmatprep.subr.mxu0 0.0
      %1124 = vmatpush2.msra.mxu0 0.0
      %1125 = vmatprep.subr.mxu0 0.0
      %1126 = vmatpush2.msra.mxu0 0.0
      %1127 = vmatprep.mubr.f32.mxu0 0.0
      %1128 = vmatmul.mubr.f32.gmra.mxu0 %v367
      %v1129 = vpop.f32.mrf.mxu0
      %v1130 = vadd.f32 0.0, %v1129
      %v1131 = vpop.f32.mrf.mxu0
      %1132 = vmatprep.mubr.f32.mxu0 0.0
      %1133 = vmatmul.mubr.f32.gmra.mxu0 %v369
      %v1134 = vpop.f32.mrf.mxu0
      %v1135 = vadd.f32 0.0, %v1134
      %v1136 = vpop.f32.mrf.mxu0
      %1137 = vdwg.mxu0
      %v1138 = vrot.slane %v333, 1
      %v1139 = vrot.slane %v334, 1
      %v1140 = vsel %vm477, %v1138, %v1139
      %v1141 = vrot.slane %v335, 1
      %v1142 = vsel %vm477, %v1139, %v1141
      %v1143 = vsel %vm336, %v1140, 0
      %v1145 = vsel %vm336, %v1142, 0
      %1147 = vmatprep.subr.mxu0 0.0
      %1148 = vmatpush1.msra.mxu0 0.0
      %1149 = vmatprep.subr.mxu0 0.0
      %1150 = vmatpush1.msra.mxu0 0.0
      %1151 = vmatprep.subr.mxu0 0.0
      %1152 = vmatpush1.msra.mxu0 0.0
      %1153 = vmatprep.subr.mxu0 0.0
      %1154 = vmatpush1.msra.mxu0 0.0
      %1155 = vmatprep.subr.mxu0 0.0
      %1156 = vmatpush1.msra.mxu0 0.0
      %1157 = vmatprep.subr.mxu0 0.0
      %1158 = vmatpush1.msra.mxu0 0.0
      %1159 = vmatprep.subr.mxu0 0.0
      %1160 = vmatpush1.msra.mxu0 %v1051
      %1161 = vmatprep.subr.mxu0 0.0
      %1162 = vmatpush1.msra.mxu0 %v1050
      %1163 = vmatprep.subr.mxu0 0.0
      %1164 = vmatpush1.msra.mxu0 %v1049
      %1165 = vmatprep.subr.mxu0 0.0
      %1166 = vmatpush1.msra.mxu0 %v1048
      %1167 = vmatprep.subr.mxu0 0.0
      %1168 = vmatpush1.msra.mxu0 %v1047
      %1169 = vmatprep.subr.mxu0 0.0
      %1170 = vmatpush1.msra.mxu0 %v1046
      %1171 = vmatprep.subr.mxu0 0.0
      %1172 = vmatpush1.msra.mxu0 %v1045
      %1173 = vmatprep.subr.mxu0 0.0
      %1174 = vmatpush1.msra.mxu0 %v1044
      %1175 = vmatprep.subr.mxu0 0.0
      %1176 = vmatpush1.msra.mxu0 %v1043
      %1177 = vmatprep.subr.mxu0 0.0
      %1178 = vmatpush1.msra.mxu0 %v1042
      %1179 = vmatprep.subr.mxu0 0.0
      %1180 = vmatpush2.msra.mxu0 0.0
      %1181 = vmatprep.subr.mxu0 0.0
      %1182 = vmatpush2.msra.mxu0 0.0
      %1183 = vmatprep.subr.mxu0 0.0
      %1184 = vmatpush2.msra.mxu0 0.0
      %1185 = vmatprep.subr.mxu0 0.0
      %1186 = vmatpush2.msra.mxu0 0.0
      %1187 = vmatprep.subr.mxu0 0.0
      %1188 = vmatpush2.msra.mxu0 0.0
      %1189 = vmatprep.subr.mxu0 0.0
      %1190 = vmatpush2.msra.mxu0 0.0
      %1191 = vmatprep.subr.mxu0 0.0
      %1192 = vmatpush2.msra.mxu0 0.0
      %1193 = vmatprep.subr.mxu0 0.0
      %1194 = vmatpush2.msra.mxu0 0.0
      %1195 = vmatprep.subr.mxu0 0.0
      %1196 = vmatpush2.msra.mxu0 0.0
      %1197 = vmatprep.subr.mxu0 0.0
      %1198 = vmatpush2.msra.mxu0 0.0
      %1199 = vmatprep.subr.mxu0 0.0
      %1200 = vmatpush2.msra.mxu0 0.0
      %1201 = vmatprep.subr.mxu0 0.0
      %1202 = vmatpush2.msra.mxu0 0.0
      %1203 = vmatprep.subr.mxu0 0.0
      %1204 = vmatpush2.msra.mxu0 0.0
      %1205 = vmatprep.subr.mxu0 0.0
      %1206 = vmatpush2.msra.mxu0 0.0
      %1207 = vmatprep.subr.mxu0 0.0
      %1208 = vmatpush2.msra.mxu0 0.0
      %1209 = vmatprep.subr.mxu0 0.0
      %1210 = vmatpush2.msra.mxu0 0.0
      %1211 = vmatprep.mubr.f32.mxu0 0.0
      %1212 = vmatmul.mubr.f32.gmra.mxu0 %v1143
      %v1213 = vpop.f32.mrf.mxu0
      %v1214 = vadd.f32 %v1130, %v1213
      %v1215 = vpop.f32.mrf.mxu0
      %1216 = vmatprep.mubr.f32.mxu0 0.0
      %1217 = vmatmul.mubr.f32.gmra.mxu0 %v1145
      %v1218 = vpop.f32.mrf.mxu0
      %v1219 = vadd.f32 %v1135, %v1218
      %v1220 = vpop.f32.mrf.mxu0
      %1221 = vdwg.mxu0
      %s1222 = scalar_lea.vmem %s7, 160
      %v1223 = vld [vmem:[%s1222] sm:$0xff]
      %v1224 = vld [vmem:[%s1222 + $0x8] sm:$0xff]
      %v1225 = vld [vmem:[%s1222 + $0x10] sm:$0xff]
      %v1226 = vld [vmem:[%s1222 + $0x18] sm:$0xff]
      %v1227 = vld [vmem:[%s1222 + $0x20] sm:$0xff]
      %v1228 = vld [vmem:[%s1222 + $0x28] sm:$0xff]
      %v1229 = vld [vmem:[%s1222 + $0x30] sm:$0xff]
      %v1230 = vld [vmem:[%s1222 + $0x38] sm:$0xff]
      %v1231 = vld [vmem:[%s1222 + $0x40] sm:$0xff]
      %v1232 = vld [vmem:[%s1222 + $0x48] sm:$0xff]
      %v1233 = vrot.slane %v333, 3
      %v1234 = vrot.slane %v334, 3
      %v1235 = vsel %vm749, %v1233, %v1234
      %v1236 = vrot.slane %v335, 3
      %v1237 = vsel %vm749, %v1234, %v1236
      %v1238 = vsel %vm336, %v1235, 0
      %v1240 = vsel %vm336, %v1237, 0
      %1242 = vmatprep.subr.mxu0 0.0
      %1243 = vmatpush1.msra.mxu0 0.0
      %1244 = vmatprep.subr.mxu0 0.0
      %1245 = vmatpush1.msra.mxu0 0.0
      %1246 = vmatprep.subr.mxu0 0.0
      %1247 = vmatpush1.msra.mxu0 0.0
      %1248 = vmatprep.subr.mxu0 0.0
      %1249 = vmatpush1.msra.mxu0 0.0
      %1250 = vmatprep.subr.mxu0 0.0
      %1251 = vmatpush1.msra.mxu0 0.0
      %1252 = vmatprep.subr.mxu0 0.0
      %1253 = vmatpush1.msra.mxu0 0.0
      %1254 = vmatprep.subr.mxu0 0.0
      %1255 = vmatpush1.msra.mxu0 %v1232
      %1256 = vmatprep.subr.mxu0 0.0
      %1257 = vmatpush1.msra.mxu0 %v1231
      %1258 = vmatprep.subr.mxu0 0.0
      %1259 = vmatpush1.msra.mxu0 %v1230
      %1260 = vmatprep.subr.mxu0 0.0
      %1261 = vmatpush1.msra.mxu0 %v1229
      %1262 = vmatprep.subr.mxu0 0.0
      %1263 = vmatpush1.msra.mxu0 %v1228
      %1264 = vmatprep.subr.mxu0 0.0
      %1265 = vmatpush1.msra.mxu0 %v1227
      %1266 = vmatprep.subr.mxu0 0.0
      %1267 = vmatpush1.msra.mxu0 %v1226
      %1268 = vmatprep.subr.mxu0 0.0
      %1269 = vmatpush1.msra.mxu0 %v1225
      %1270 = vmatprep.subr.mxu0 0.0
      %1271 = vmatpush1.msra.mxu0 %v1224
      %1272 = vmatprep.subr.mxu0 0.0
      %1273 = vmatpush1.msra.mxu0 %v1223
      %1274 = vmatprep.subr.mxu0 0.0
      %1275 = vmatpush2.msra.mxu0 0.0
      %1276 = vmatprep.subr.mxu0 0.0
      %1277 = vmatpush2.msra.mxu0 0.0
      %1278 = vmatprep.subr.mxu0 0.0
      %1279 = vmatpush2.msra.mxu0 0.0
      %1280 = vmatprep.subr.mxu0 0.0
      %1281 = vmatpush2.msra.mxu0 0.0
      %1282 = vmatprep.subr.mxu0 0.0
      %1283 = vmatpush2.msra.mxu0 0.0
      %1284 = vmatprep.subr.mxu0 0.0
      %1285 = vmatpush2.msra.mxu0 0.0
      %1286 = vmatprep.subr.mxu0 0.0
      %1287 = vmatpush2.msra.mxu0 0.0
      %1288 = vmatprep.subr.mxu0 0.0
      %1289 = vmatpush2.msra.mxu0 0.0
      %1290 = vmatprep.subr.mxu0 0.0
      %1291 = vmatpush2.msra.mxu0 0.0
      %1292 = vmatprep.subr.mxu0 0.0
      %1293 = vmatpush2.msra.mxu0 0.0
      %1294 = vmatprep.subr.mxu0 0.0
      %1295 = vmatpush2.msra.mxu0 0.0
      %1296 = vmatprep.subr.mxu0 0.0
      %1297 = vmatpush2.msra.mxu0 0.0
      %1298 = vmatprep.subr.mxu0 0.0
      %1299 = vmatpush2.msra.mxu0 0.0
      %1300 = vmatprep.subr.mxu0 0.0
      %1301 = vmatpush2.msra.mxu0 0.0
      %1302 = vmatprep.subr.mxu0 0.0
      %1303 = vmatpush2.msra.mxu0 0.0
      %1304 = vmatprep.subr.mxu0 0.0
      %1305 = vmatpush2.msra.mxu0 0.0
      %1306 = vmatprep.mubr.f32.mxu0 0.0
      %1307 = vmatmul.mubr.f32.gmra.mxu0 %v1238
      %v1308 = vpop.f32.mrf.mxu0
      %v1309 = vadd.f32 0.0, %v1308
      %v1310 = vpop.f32.mrf.mxu0
      %1311 = vmatprep.mubr.f32.mxu0 0.0
      %1312 = vmatmul.mubr.f32.gmra.mxu0 %v1240
      %v1313 = vpop.f32.mrf.mxu0
      %v1314 = vadd.f32 0.0, %v1313
      %v1315 = vpop.f32.mrf.mxu0
      %1316 = vdwg.mxu0
      %v1317 = vadd.f32 %v1214, %v1309
      %v1318 = vadd.f32 %v1219, %v1314
      %v1319 = vld [vmem:[%s8] sm:$0x1]
      %v1321 = vlaneseq
      %v1322 = vshrl.u32 %v1321, 7
      %v1323 = vsub.s32 0, %v1322
      %v1324 = vrot.slane %v1319, %v1323
      %v1326 = vadd.f32 %v1317, %v1324
      %v1327 = vadd.f32 %v1318, %v1324
      %v1328 = vadd.f32 %v1034, %v1326
      %v1329 = vadd.f32 %v1039, %v1327
      %v1330 = vmax.f32 %v1328, 0.0
      %v1331 = vmax.f32 %v1329, 0.0
      %1332 = vst [vmem:[%s332] sm:$0xff] %v1330
      %1333 = vst [vmem:[%s332 + $0x8] sm:$0xff] %v1331
      %p1334 = scmp.lt.s32.totalorder %s20, 1
      %s1335 = scalar_select %p1334, %s20, 1
      %s1336 = smul.addr %s1335, 2
      %s1337 = smul.addr %s1336, 8
      %s1338 = scalar_lea.vmem %s9, %s1337
      // Predicated region
      $region57: #{bottleneck_forward.1} parent=55 // pred_check
        %p1339 = pneg %p232
      $region58: #{bottleneck_forward.1} parent=55 // pred_check_branch
        %1341 = sbr.rel (%p1339) target = $region60
      $region59: #{bottleneck_forward.1} parent=55 // pred_region
        _
      $region60: #{bottleneck_forward.1} parent=55 // pred_fallthru
        _
    $region56: #{bottleneck_forward.1} parent=5 // pred_fallthru
      _
    %p1342 = scmp.le.s32.totalorder 2, %s15
    // Predicated region
    $region61: #{bottleneck_forward.1} parent=5 // pred_check
      %p1343 = pneg %p1342
    $region62: #{bottleneck_forward.1} parent=5 // pred_check_branch
      %1345 = sbr.rel (%p1343) target = $region64
    $region63: #{bottleneck_forward.1} parent=5 // pred_region
      %s1346 = ssub.s32 %s15, 2
      // Predicated region
      $region65: #{bottleneck_forward.1} parent=63 // pred_check
        %p1347 = pneg %p238
      $region66: #{bottleneck_forward.1} parent=63 // pred_check_branch
        %1349 = sbr.rel (%p1347) target = $region68
      $region67: #{bottleneck_forward.1} parent=63 // pred_region
        %p1350 = scmp.lt.s32.totalorder %s21, 1
        %s1351 = scalar_select %p1350, %s21, 1
        %s1352 = smul.addr %s1351, 2
        %s1353 = smul.addr %s1352, 8
        %s1354 = scalar_lea.vmem %s9, %s1353
      $region68: #{bottleneck_forward.1} parent=63 // pred_fallthru
        _
    $region64: #{bottleneck_forward.1} parent=5 // pred_fallthru
      _
  $region6: #{bottleneck_forward.1} parent=0 // loop_footer
    %s19 = sadd.s32 1, %s15
  $region7: #{bottleneck_forward.1} parent=0 // loop_footer_branch
    %14 = sbr.rel target = $region3
  $region8: #{bottleneck_forward.1} parent=0 // loop_exit
    _

</llo_original>
